<compile_context>
chip_gen: v7x
topology: tpu7x:2x2x1
jax: 0.10.0
libtpu: 0.0.40
codegen_flags: <defaults>
</compile_context>

<pallas_src>
import functools

import numpy as np
import jax
import jax.numpy as jnp
from jax import lax
from jax.experimental import pallas as pl
from jax.experimental.pallas import tpu as pltpu

_BN_EPS = 1e-5


def _round_up(x, m):
    return (x + m - 1) // m * m


# ===========================================================================
# Kernel 1: 3x3 stride-1 conv on the row-tiled flat layout.
#   x_ref     : (1, 1, Mext,  TK)  bf16   Mext  = (TR+3)*Wpa   (TR rows + halo)
#   w_ref     : (9, TK, TN)        bf16   BN scale folded in
#   shift_ref : (1, TN)            f32
#   r_ref     : (1, 1, Mtile, TN)  bf16   optional fused residual
#   o_ref     : (1, 1, Mtile, TN)         Mtile = TR*Wpa
#   acc_ref   : (Mtile, TN)        f32    scratch (only when nk > 1)
# ===========================================================================
def _conv3x3_kernel(x_ref, w_ref, shift_ref, *rest, wpa, mtile, relu, nk,
                    has_resid):
    if has_resid:
        r_ref = rest[0]
        rest = rest[1:]
    else:
        r_ref = None
    o_ref = rest[0]
    acc_ref = rest[1] if nk > 1 else None
    kidx = pl.program_id(3)

    # 9 shifted-window tap GEMMs over this input-channel chunk.
    # The chained sum keeps at most ~2 (Mtile, TN) f32 temporaries live.
    part = jnp.dot(x_ref[0, 0, pl.ds(0, mtile), :], w_ref[0],
                   preferred_element_type=jnp.float32)
    for t in range(1, 9):
        dy, dx = divmod(t, 3)
        off = dy * wpa + dx
        part = part + jnp.dot(x_ref[0, 0, pl.ds(off, mtile), :], w_ref[t],
                              preferred_element_type=jnp.float32)

    def _epilogue(acc):
        acc = acc + shift_ref[...]                          # folded BN shift
        if has_resid:
            acc = acc + r_ref[0, 0, :, :].astype(jnp.float32)
        if relu:
            acc = jnp.maximum(acc, 0.0)
        o_ref[0, 0, :, :] = acc.astype(o_ref.dtype)

    if nk == 1:                      # whole K reduction in one step: no scratch
        _epilogue(part)
    else:
        @pl.when(kidx == 0)
        def _():
            acc_ref[...] = part      # write on first step (no zero-init pass)

        @pl.when(kidx > 0)
        def _():
            acc_ref[...] += part

        @pl.when(kidx == nk - 1)
        def _():
            _epilogue(acc_ref[...])


def _row_tile(h, wpa, want_split):
    """Rows per spatial tile: bounded for VMEM, divides h, splits when the
    rest of the grid would otherwise have a single parallel slice."""
    cap = max(1, 2048 // wpa)            # keep Mtile = tr*wpa modest
    tr = min(16, h, cap)
    while h % tr:
        tr -= 1
    if want_split and tr == h and h > 1:
        tr = max(1, tr // 2)
        while h % tr:
            tr -= 1
    return tr


def _prep_tiles(x, tr, wpa, cin_p):
    """NHWC -> (N, NT, (TR+3)*Wpa, cin_p): overlapping row bands with halo,
    width zero-padded to Wpa (left pad 1), channels zero-padded to cin_p."""
    n, h, w, c = x.shape
    nt = h // tr
    xp = jnp.pad(x.astype(jnp.bfloat16),
                 ((0, 0), (1, 2), (1, wpa - w - 1), (0, cin_p - c)))
    tiles = [xp[:, t * tr: t * tr + tr + 3] for t in range(nt)]
    xt = jnp.stack(tiles, axis=1)                  # (n, nt, tr+3, wpa, cin_p)
    return xt.reshape(n, nt, (tr + 3) * wpa, cin_p)


def _prep_resid(x, tr, wpa, cout_p):
    """NHWC -> (N, NT, TR*Wpa, cout_p) residual in the kernel's output layout."""
    n, h, w, c = x.shape
    nt = h // tr
    xp = jnp.pad(x.astype(jnp.bfloat16),
                 ((0, 0), (0, 0), (0, wpa - w), (0, cout_p - c)))
    return xp.reshape(n, nt, tr * wpa, cout_p)


def _conv3x3(x, p, *, relu=True, resid=None, out_dtype=jnp.bfloat16):
    n, h, w, c = x.shape
    assert c == p["cin"], (c, p["cin"])
    cin_p, cout_p = p["w"].shape[1], p["w"].shape[2]
    cout = p["cout"]
    wpa = _round_up(w + 2, 16)
    tk = 256 if cin_p % 256 == 0 else 128
    tn = 128
    nk = cin_p // tk
    nj = cout_p // tn
    tr = _row_tile(h, wpa, want_split=(n * nj < 2))
    nt = h // tr
    mext = (tr + 3) * wpa
    mtile = tr * wpa

    xt = _prep_tiles(x, tr, wpa, cin_p)
    args = [xt, p["w"], p["shift"]]
    in_specs = [
        pl.BlockSpec((1, 1, mext, tk), lambda b, t, j, k: (b, t, 0, k)),
        pl.BlockSpec((9, tk, tn), lambda b, t, j, k: (0, k, j)),
        pl.BlockSpec((1, tn), lambda b, t, j, k: (0, j)),
    ]
    has_resid = resid is not None
    if has_resid:
        args.append(_prep_resid(resid, tr, wpa, cout_p))
        in_specs.append(
            pl.BlockSpec((1, 1, mtile, tn), lambda b, t, j, k: (b, t, 0, j)))
    scratch = [] if nk == 1 else [pltpu.VMEM((mtile, tn), jnp.float32)]
    kern = functools.partial(_conv3x3_kernel, wpa=wpa, mtile=mtile, relu=relu,
                             nk=nk, has_resid=has_resid)
    out = pl.pallas_call(
        kern,
        out_shape=jax.ShapeDtypeStruct((n, nt, mtile, cout_p), out_dtype),
        grid=(n, nt, nj, nk),
        in_specs=in_specs,
        out_specs=pl.BlockSpec((1, 1, mtile, tn),
                               lambda b, t, j, k: (b, t, 0, j)),
        scratch_shapes=scratch,
        compiler_params=pltpu.CompilerParams(
            dimension_semantics=("parallel", "parallel", "parallel",
                                 "arbitrary")),
    )(*args)
    # (n, nt, mtile, cout_p) -> NHWC, dropping junk columns / padded channels.
    out = out.reshape(n, nt, tr, wpa, cout_p)[:, :, :, :w, :cout]
    return out.reshape(n, h, w, cout)


# ===========================================================================
# Kernel 2: generic K-tiled GEMM (+shift, optional ReLU) for 1x1/strided convs.
# ===========================================================================
def _gemm_kernel(x_ref, w_ref, shift_ref, o_ref, acc_ref, *, relu):
    kidx = pl.program_id(2)
    part = jnp.dot(x_ref[...], w_ref[...], preferred_element_type=jnp.float32)

    @pl.when(kidx == 0)
    def _():
        acc_ref[...] = part

    @pl.when(kidx > 0)
    def _():
        acc_ref[...] += part

    @pl.when(kidx == pl.num_programs(2) - 1)
    def _():
        acc = acc_ref[...] + shift_ref[...]
        if relu:
            acc = jnp.maximum(acc, 0.0)
        o_ref[...] = acc.astype(o_ref.dtype)


def _gemm_bn_act(x, w, shift, *, relu, out_dtype=jnp.bfloat16):
    """y = act((x @ w) + shift) with bf16 operands, f32 accumulation."""
    m, k = x.shape
    _, n = w.shape
    kp = _round_up(k, 128)
    tk = 512 if kp % 512 == 0 else (256 if kp % 256 == 0 else 128)
    np_ = _round_up(n, 128)
    tn = 256 if np_ % 256 == 0 else 128
    mp = _round_up(m, 8)
    tm = 512 if mp >= 512 else mp
    mp = _round_up(mp, tm)
    xp = jnp.pad(x.astype(jnp.bfloat16), ((0, mp - m), (0, kp - k)))
    wpad = jnp.pad(w.astype(jnp.bfloat16), ((0, kp - k), (0, np_ - n)))
    sp = jnp.pad(shift.astype(jnp.float32), (0, np_ - n)).reshape(1, np_)
    out = pl.pallas_call(
        functools.partial(_gemm_kernel, relu=relu),
        out_shape=jax.ShapeDtypeStruct((mp, np_), out_dtype),
        grid=(mp // tm, np_ // tn, kp // tk),
        in_specs=[
            pl.BlockSpec((tm, tk), lambda i, j, kk: (i, kk)),
            pl.BlockSpec((tk, tn), lambda i, j, kk: (kk, j)),
            pl.BlockSpec((1, tn), lambda i, j, kk: (0, j)),
        ],
        out_specs=pl.BlockSpec((tm, tn), lambda i, j, kk: (i, j)),
        scratch_shapes=[pltpu.VMEM((tm, tn), jnp.float32)],
        compiler_params=pltpu.CompilerParams(
            dimension_semantics=("parallel", "parallel", "arbitrary")),
    )(xp, wpad, sp)
    return out[:m, :n]


# ===========================================================================
# Parameter construction (eval-mode BN folded; bf16 weights).
# ===========================================================================
def _make_conv3x3(key, cin, cout, *, bias):
    wkey, bkey = jax.random.split(key)
    fan_in = 9 * cin
    w = jax.random.normal(wkey, (3, 3, cin, cout), jnp.float32) * np.sqrt(2.0 / fan_in)
    b = (0.01 * jax.random.normal(bkey, (cout,), jnp.float32)) if bias \
        else jnp.zeros((cout,), jnp.float32)
    scale = 1.0 / np.sqrt(1.0 + _BN_EPS)            # fresh-init eval BatchNorm
    w = (w * scale).reshape(9, cin, cout)
    cin_p = _round_up(cin, 128)
    cout_p = _round_up(cout, 128)
    w = jnp.pad(w, ((0, 0), (0, cin_p - cin), (0, cout_p - cout)))
    shift = jnp.pad(b * scale, (0, cout_p - cout)).reshape(1, cout_p)
    return {"w": w.astype(jnp.bfloat16), "shift": shift.astype(jnp.float32),
            "cin": cin, "cout": cout}


def _make_conv_gemm(key, cin, cout, k, *, stride=1, pad=None, relu=True,
                    bn=True, bias=True):
    if pad is None:
        pad = k // 2
    wkey, bkey = jax.random.split(key)
    fan_in = cin * k * k
    w = jax.random.normal(wkey, (k, k, cin, cout), jnp.float32) * np.sqrt(2.0 / fan_in)
    b = (0.01 * jax.random.normal(bkey, (cout,), jnp.float32)) if bias \
        else jnp.zeros((cout,), jnp.float32)
    scale = (1.0 / np.sqrt(1.0 + _BN_EPS)) if bn else 1.0
    return {"w": (w * scale).reshape(k * k * cin, cout).astype(jnp.bfloat16),
            "shift": (b * scale).astype(jnp.float32),
            "k": k, "stride": stride, "pad": pad, "relu": relu}


def _make_double_conv(key, cin, cout):
    k1, k2 = jax.random.split(key)
    return [_make_conv3x3(k1, cin, cout, bias=True),
            _make_conv3x3(k2, cout, cout, bias=True)]


# ===========================================================================
# Conv application helpers
# ===========================================================================
def _im2col(x, k, stride, pad):
    n, h, w, c = x.shape
    ho = (h + 2 * pad - k) // stride + 1
    wo = (w + 2 * pad - k) // stride + 1
    xp = jnp.pad(x, ((0, 0), (pad, pad), (pad, pad), (0, 0)))
    cols = []
    for dy in range(k):
        for dx in range(k):
            cols.append(xp[:, dy:dy + stride * (ho - 1) + 1:stride,
                           dx:dx + stride * (wo - 1) + 1:stride, :])
    patches = jnp.stack(cols, axis=3)
    return patches.reshape(n * ho * wo, k * k * c), (n, ho, wo)


def _apply_conv_gemm(x, p, *, out_dtype=jnp.bfloat16):
    patches, (n, ho, wo) = _im2col(x, p["k"], p["stride"], p["pad"])
    cout = p["w"].shape[1]
    y = _gemm_bn_act(patches, p["w"], p["shift"], relu=p["relu"],
                     out_dtype=out_dtype)
    return y.reshape(n, ho, wo, cout)


def _apply_double_conv(p, x):
    y = _conv3x3(x, p[0], relu=True)
    return _conv3x3(y, p[1], relu=True)


def _maxpool2(x):  # nn.MaxPool2d(2)
    n, h, w, c = x.shape
    return x.reshape(n, h // 2, 2, w // 2, 2, c).max(axis=(2, 4))


def _maxpool3x3_s2_p1(x):  # ResNet stem maxpool
    y = lax.reduce_window(x.astype(jnp.float32), -jnp.inf, lax.max,
                          (1, 3, 3, 1), (1, 2, 2, 1),
                          [(0, 0), (1, 1), (1, 1), (0, 0)])
    return y.astype(x.dtype)


def _ac_coords(in_size, out_size):
    if out_size == 1 or in_size == 1:
        src = jnp.zeros((out_size,), jnp.float32)
    else:
        src = jnp.arange(out_size, dtype=jnp.float32) * ((in_size - 1.0) / (out_size - 1.0))
    i0 = jnp.clip(jnp.floor(src).astype(jnp.int32), 0, in_size - 1)
    i1 = jnp.clip(i0 + 1, 0, in_size - 1)
    return i0, i1, src - i0.astype(jnp.float32)


def _bilinear_resize_ac(x, oh, ow):  # F.interpolate(..., align_corners=True)
    dtype = x.dtype
    x = x.astype(jnp.float32)
    n, h, w, c = x.shape
    y0, y1, fy = _ac_coords(h, oh)
    x0, x1, fx = _ac_coords(w, ow)
    top, bot = x[:, y0, :, :], x[:, y1, :, :]
    fy = fy.reshape(1, oh, 1, 1)
    rows = top * (1.0 - fy) + bot * fy
    lft, rgt = rows[:, :, x0, :], rows[:, :, x1, :]
    fx = fx.reshape(1, 1, ow, 1)
    return (lft * (1.0 - fx) + rgt * fx).astype(dtype)


def _apply_up(p, x1, x2):  # up.forward(x1, x2)
    n, h, w, c = x1.shape
    x1 = _bilinear_resize_ac(x1, 2 * h, 2 * w)
    dh = x2.shape[1] - x1.shape[1]
    dw = x2.shape[2] - x1.shape[2]
    if dh or dw:
        x1 = jnp.pad(x1, ((0, 0), (dh // 2, dh - dh // 2),
                          (dw // 2, dw - dw // 2), (0, 0)))
    x = jnp.concatenate([x2, x1], axis=-1)        # torch.cat([x2, x1], dim=1)
    return _apply_double_conv(p, x)


# ===========================================================================
# ResNet18 image encoder (feature trunk, out_dim = 512)
# ===========================================================================
def _make_basic_block(key, cin, cout, stride):
    k1, k2, k3 = jax.random.split(key, 3)
    if stride == 1 and cin == cout:
        return {"conv1": _make_conv3x3(k1, cin, cout, bias=False),
                "conv2": _make_conv3x3(k2, cout, cout, bias=False),
                "down": None}
    return {"conv1": _make_conv_gemm(k1, cin, cout, 3, stride=stride,
                                     relu=True, bn=True, bias=False),
            "conv2": _make_conv3x3(k2, cout, cout, bias=False),
            "down": _make_conv_gemm(k3, cin, cout, 1, stride=stride,
                                    relu=False, bn=True, bias=False)}


def _apply_basic_block(p, x):
    if p["down"] is None:
        h1 = _conv3x3(x, p["conv1"], relu=True)
        # conv2 with residual add + ReLU fused into the epilogue
        return _conv3x3(h1, p["conv2"], relu=True, resid=x)
    out1 = _apply_conv_gemm(x, p["conv1"])          # 3x3 stride-2 (+BN+ReLU)
    idn = _apply_conv_gemm(x, p["down"])            # 1x1 stride-2 downsample
    return _conv3x3(out1, p["conv2"], relu=True, resid=idn)


def _make_resnet18(key):
    keys = jax.random.split(key, 9)
    cfg = [(64, 64, 1), (64, 64, 1), (64, 128, 2), (128, 128, 1),
           (128, 256, 2), (256, 256, 1), (256, 512, 2), (512, 512, 1)]
    return {"conv1": _make_conv_gemm(keys[0], 3, 64, 7, stride=2, pad=3,
                                     relu=True, bn=True, bias=False),
            "blocks": [_make_basic_block(keys[i + 1], ci, co, s)
                       for i, (ci, co, s) in enumerate(cfg)]}


def _apply_resnet18(p, rgb):
    x = _apply_conv_gemm(rgb, p["conv1"])
    x = _maxpool3x3_s2_p1(x)
    for blk in p["blocks"]:
        x = _apply_basic_block(blk, x)
    return x                                        # [N, H/32, W/32, 512]


# ===========================================================================
# UNetResNet5Skip
# ===========================================================================
class UNetResNet5SkipPallas:
    def __init__(self, key, in_channels=3, w=2, n_classes=2):
        # The reference hard-codes up0 = up(512+256+512, 128*w): only valid at w=2.
        assert 640 * w == 512 + 256 + 512, "reference channel plumbing requires w=2"
        ks = jax.random.split(key, 16)
        c = lambda m: int(m * w)
        self.inc = _make_double_conv(ks[0], in_channels, c(16))
        self.down1 = _make_double_conv(ks[1], c(16), c(32))
        self.down2 = _make_double_conv(ks[2], c(32), c(64))
        self.down3 = _make_double_conv(ks[3], c(64), c(128))
        self.down4 = _make_double_conv(ks[4], c(128), c(256))
        self.down5 = _make_double_conv(ks[5], c(256), c(256))
        self.image_encoder = _make_resnet18(ks[6])
        self.reduce_dim = _make_conv_gemm(ks[7], 512, c(128), 1, relu=True,
                                          bn=True, bias=True)
        self.up0 = _make_double_conv(ks[8], 512 + 256 + 512, c(128))
        self.up1 = _make_double_conv(ks[9], c(256), c(64))
        self.up2 = _make_double_conv(ks[10], c(128), c(32))
        self.up3 = _make_double_conv(ks[11], c(64), c(16))
        self.up4 = _make_double_conv(ks[12], c(32), c(16))
        self.outc = _make_conv_gemm(ks[13], c(16), n_classes, 1, relu=False,
                                    bn=False, bias=True)
        # Single jit over the whole forward: kernels + glue fuse into one program.
        self._fwd = jax.jit(self._forward)

    def _forward(self, x_nchw, rgb_nchw):
        x = jnp.transpose(x_nchw, (0, 2, 3, 1)).astype(jnp.bfloat16)
        rgb = jnp.transpose(rgb_nchw, (0, 2, 3, 1)).astype(jnp.bfloat16)
        x1 = _apply_double_conv(self.inc, x)
        x2 = _apply_double_conv(self.down1, _maxpool2(x1))
        x3 = _apply_double_conv(self.down2, _maxpool2(x2))
        x4 = _apply_double_conv(self.down3, _maxpool2(x3))
        x5 = _apply_double_conv(self.down4, _maxpool2(x4))
        x6 = _apply_double_conv(self.down5, _maxpool2(x5))
        img = _apply_resnet18(self.image_encoder, rgb)
        img = _apply_conv_gemm(img, self.reduce_dim)
        img = _bilinear_resize_ac(img, x6.shape[1], x6.shape[2])
        cat = jnp.concatenate([x6, img], axis=-1)   # torch.cat((x6, img_feat), 1)
        y = _apply_up(self.up0, cat, x5)
        y = _apply_up(self.up1, y, x4)
        y = _apply_up(self.up2, y, x3)
        y = _apply_up(self.up3, y, x2)
        y = _apply_up(self.up4, y, x1)
        feat = jnp.transpose(y.astype(jnp.float32), (0, 3, 1, 2))
        out = _apply_conv_gemm(y, self.outc, out_dtype=jnp.float32)
        out = jnp.transpose(out, (0, 3, 1, 2))      # back to NCHW
        return out, feat

    def __call__(self, x_nchw, rgb_nchw, return_feat=False):
        out, feat = self._fwd(x_nchw, rgb_nchw)
        if return_feat:
            return out, feat
        return out


if __name__ == "__main__":
    key = jax.random.PRNGKey(0)
    pkey, xkey, rkey, tkey = jax.random.split(key, 4)

    # --- tolerance-asserted self-test of the core 3x3 Pallas conv vs lax.conv ---
    tc_in, tc_out, th, tw = 8, 32, 8, 8
    tp = _make_conv3x3(jax.random.PRNGKey(7), tc_in, tc_out, bias=True)
    xt = jax.random.normal(tkey, (1, th, tw, tc_in), jnp.float32)
    got = _conv3x3(xt, tp, relu=True, out_dtype=jnp.float32)
    wf = tp["w"][:, :tc_in, :tc_out].astype(jnp.float32).reshape(3, 3, tc_in, tc_out)
    ref = lax.conv_general_dilated(
        xt.astype(jnp.bfloat16).astype(jnp.float32), wf,
        window_strides=(1, 1), padding="SAME",
        dimension_numbers=("NHWC", "HWIO", "NHWC"),
        precision=lax.Precision.HIGHEST)
    ref = jnp.maximum(ref + tp["shift"][0, :tc_out], 0.0)
    err = float(jnp.max(jnp.abs(got - ref)))
    assert err < 5e-2, f"conv3x3 self-test max abs err {err}"

    model = UNetResNet5SkipPallas(pkey, in_channels=3, w=2, n_classes=2)
    # 5 UNet downsamples + the /32 ResNet trunk need H, W % 32 == 0.
    x = jax.random.normal(xkey, (1, 3, 64, 64), jnp.float32)
    rgb = jax.random.normal(rkey, (1, 3, 64, 64), jnp.float32)
    out = model(x, rgb)
    out = jax.block_until_ready(out)
    assert out.shape == (1, 2, 64, 64), out.shape
    assert bool(jnp.all(jnp.isfinite(out)))
    print("KERNEL_OK")
</pallas_src>

<mosaic_0001>
module attributes {stable_mosaic.version = 11 : i64} {
  func.func @_conv3x3_kernel(%arg0: i32, %arg1: i32, %arg2: i32, %arg3: i32, %arg4: memref<1x1x112x128xbf16, #tpu.memory_space<vmem>>, %arg5: memref<9x128x128xbf16, #tpu.memory_space<vmem>>, %arg6: memref<1x128xf32, #tpu.memory_space<vmem>>, %arg7: memref<1x1x64x128xf32, #tpu.memory_space<vmem>>) attributes {dimension_semantics = [#tpu.dimension_semantics<parallel>, #tpu.dimension_semantics<parallel>, #tpu.dimension_semantics<parallel>, #tpu.dimension_semantics<arbitrary>], iteration_bounds = array<i64: 1, 2, 1, 1>, scalar_prefetch = 0 : i64, scratch_operands = 0 : i64, tpu.core_type = #tpu.core_type<tc>, window_params = [{transform_indices = @transform_0, window_bounds = array<i64: 1, 1, 112, 128>}, {transform_indices = @transform_1, window_bounds = array<i64: 9, 128, 128>}, {transform_indices = @transform_2, window_bounds = array<i64: 1, 128>}, {transform_indices = @transform_3, window_bounds = array<i64: 1, 1, 64, 128>}]} {
    %c0 = arith.constant 0 : index
    %c0_0 = arith.constant 0 : index
    %c0_1 = arith.constant 0 : index
    %c0_2 = arith.constant 0 : index
    %0 = vector.load %arg4[%c0, %c0_0, %c0_1, %c0_2] : memref<1x1x112x128xbf16, #tpu.memory_space<vmem>>, vector<1x1x64x128xbf16>
    %1 = vector.shape_cast %0 : vector<1x1x64x128xbf16> to vector<64x128xbf16>
    %c0_3 = arith.constant 0 : index
    %c0_4 = arith.constant 0 : index
    %c0_5 = arith.constant 0 : index
    %2 = vector.load %arg5[%c0_3, %c0_4, %c0_5] : memref<9x128x128xbf16, #tpu.memory_space<vmem>>, vector<1x128x128xbf16>
    %3 = vector.shape_cast %2 : vector<1x128x128xbf16> to vector<128x128xbf16>
    %cst = arith.constant dense<0.000000e+00> : vector<64x128xf32>
    %4 = tpu.matmul %1, %3, %cst {dimension_numbers = #tpu.dot_dimension_numbers<[1], [0], [0], [1], [0, 0, 1, 1], [], []>} : vector<64x128xbf16>, vector<128x128xbf16>, vector<64x128xf32> -> vector<64x128xf32>
    %c0_6 = arith.constant 0 : index
    %c0_7 = arith.constant 0 : index
    %c1 = arith.constant 1 : index
    %c0_8 = arith.constant 0 : index
    %5 = vector.load %arg4[%c0_6, %c0_7, %c1, %c0_8] : memref<1x1x112x128xbf16, #tpu.memory_space<vmem>>, vector<1x1x64x128xbf16>
    %6 = vector.shape_cast %5 : vector<1x1x64x128xbf16> to vector<64x128xbf16>
    %c1_9 = arith.constant 1 : index
    %c0_10 = arith.constant 0 : index
    %c0_11 = arith.constant 0 : index
    %7 = vector.load %arg5[%c1_9, %c0_10, %c0_11] : memref<9x128x128xbf16, #tpu.memory_space<vmem>>, vector<1x128x128xbf16>
    %8 = vector.shape_cast %7 : vector<1x128x128xbf16> to vector<128x128xbf16>
    %cst_12 = arith.constant dense<0.000000e+00> : vector<64x128xf32>
    %9 = tpu.matmul %6, %8, %cst_12 {dimension_numbers = #tpu.dot_dimension_numbers<[1], [0], [0], [1], [0, 0, 1, 1], [], []>} : vector<64x128xbf16>, vector<128x128xbf16>, vector<64x128xf32> -> vector<64x128xf32>
    %10 = arith.addf %4, %9 : vector<64x128xf32>
    %c0_13 = arith.constant 0 : index
    %c0_14 = arith.constant 0 : index
    %c2 = arith.constant 2 : index
    %c0_15 = arith.constant 0 : index
    %11 = vector.load %arg4[%c0_13, %c0_14, %c2, %c0_15] : memref<1x1x112x128xbf16, #tpu.memory_space<vmem>>, vector<1x1x64x128xbf16>
    %12 = vector.shape_cast %11 : vector<1x1x64x128xbf16> to vector<64x128xbf16>
    %c2_16 = arith.constant 2 : index
    %c0_17 = arith.constant 0 : index
    %c0_18 = arith.constant 0 : index
    %13 = vector.load %arg5[%c2_16, %c0_17, %c0_18] : memref<9x128x128xbf16, #tpu.memory_space<vmem>>, vector<1x128x128xbf16>
    %14 = vector.shape_cast %13 : vector<1x128x128xbf16> to vector<128x128xbf16>
    %cst_19 = arith.constant dense<0.000000e+00> : vector<64x128xf32>
    %15 = tpu.matmul %12, %14, %cst_19 {dimension_numbers = #tpu.dot_dimension_numbers<[1], [0], [0], [1], [0, 0, 1, 1], [], []>} : vector<64x128xbf16>, vector<128x128xbf16>, vector<64x128xf32> -> vector<64x128xf32>
    %16 = arith.addf %10, %15 : vector<64x128xf32>
    %c0_20 = arith.constant 0 : index
    %c0_21 = arith.constant 0 : index
    %c16 = arith.constant 16 : index
    %c0_22 = arith.constant 0 : index
    %17 = vector.load %arg4[%c0_20, %c0_21, %c16, %c0_22] : memref<1x1x112x128xbf16, #tpu.memory_space<vmem>>, vector<1x1x64x128xbf16>
    %18 = vector.shape_cast %17 : vector<1x1x64x128xbf16> to vector<64x128xbf16>
    %c3 = arith.constant 3 : index
    %c0_23 = arith.constant 0 : index
    %c0_24 = arith.constant 0 : index
    %19 = vector.load %arg5[%c3, %c0_23, %c0_24] : memref<9x128x128xbf16, #tpu.memory_space<vmem>>, vector<1x128x128xbf16>
    %20 = vector.shape_cast %19 : vector<1x128x128xbf16> to vector<128x128xbf16>
    %cst_25 = arith.constant dense<0.000000e+00> : vector<64x128xf32>
    %21 = tpu.matmul %18, %20, %cst_25 {dimension_numbers = #tpu.dot_dimension_numbers<[1], [0], [0], [1], [0, 0, 1, 1], [], []>} : vector<64x128xbf16>, vector<128x128xbf16>, vector<64x128xf32> -> vector<64x128xf32>
    %22 = arith.addf %16, %21 : vector<64x128xf32>
    %c0_26 = arith.constant 0 : index
    %c0_27 = arith.constant 0 : index
    %c17 = arith.constant 17 : index
    %c0_28 = arith.constant 0 : index
    %23 = vector.load %arg4[%c0_26, %c0_27, %c17, %c0_28] : memref<1x1x112x128xbf16, #tpu.memory_space<vmem>>, vector<1x1x64x128xbf16>
    %24 = vector.shape_cast %23 : vector<1x1x64x128xbf16> to vector<64x128xbf16>
    %c4 = arith.constant 4 : index
    %c0_29 = arith.constant 0 : index
    %c0_30 = arith.constant 0 : index
    %25 = vector.load %arg5[%c4, %c0_29, %c0_30] : memref<9x128x128xbf16, #tpu.memory_space<vmem>>, vector<1x128x128xbf16>
    %26 = vector.shape_cast %25 : vector<1x128x128xbf16> to vector<128x128xbf16>
    %cst_31 = arith.constant dense<0.000000e+00> : vector<64x128xf32>
    %27 = tpu.matmul %24, %26, %cst_31 {dimension_numbers = #tpu.dot_dimension_numbers<[1], [0], [0], [1], [0, 0, 1, 1], [], []>} : vector<64x128xbf16>, vector<128x128xbf16>, vector<64x128xf32> -> vector<64x128xf32>
    %28 = arith.addf %22, %27 : vector<64x128xf32>
    %c0_32 = arith.constant 0 : index
    %c0_33 = arith.constant 0 : index
    %c18 = arith.constant 18 : index
    %c0_34 = arith.constant 0 : index
    %29 = vector.load %arg4[%c0_32, %c0_33, %c18, %c0_34] : memref<1x1x112x128xbf16, #tpu.memory_space<vmem>>, vector<1x1x64x128xbf16>
    %30 = vector.shape_cast %29 : vector<1x1x64x128xbf16> to vector<64x128xbf16>
    %c5 = arith.constant 5 : index
    %c0_35 = arith.constant 0 : index
    %c0_36 = arith.constant 0 : index
    %31 = vector.load %arg5[%c5, %c0_35, %c0_36] : memref<9x128x128xbf16, #tpu.memory_space<vmem>>, vector<1x128x128xbf16>
    %32 = vector.shape_cast %31 : vector<1x128x128xbf16> to vector<128x128xbf16>
    %cst_37 = arith.constant dense<0.000000e+00> : vector<64x128xf32>
    %33 = tpu.matmul %30, %32, %cst_37 {dimension_numbers = #tpu.dot_dimension_numbers<[1], [0], [0], [1], [0, 0, 1, 1], [], []>} : vector<64x128xbf16>, vector<128x128xbf16>, vector<64x128xf32> -> vector<64x128xf32>
    %34 = arith.addf %28, %33 : vector<64x128xf32>
    %c0_38 = arith.constant 0 : index
    %c0_39 = arith.constant 0 : index
    %c32 = arith.constant 32 : index
    %c0_40 = arith.constant 0 : index
    %35 = vector.load %arg4[%c0_38, %c0_39, %c32, %c0_40] : memref<1x1x112x128xbf16, #tpu.memory_space<vmem>>, vector<1x1x64x128xbf16>
    %36 = vector.shape_cast %35 : vector<1x1x64x128xbf16> to vector<64x128xbf16>
    %c6 = arith.constant 6 : index
    %c0_41 = arith.constant 0 : index
    %c0_42 = arith.constant 0 : index
    %37 = vector.load %arg5[%c6, %c0_41, %c0_42] : memref<9x128x128xbf16, #tpu.memory_space<vmem>>, vector<1x128x128xbf16>
    %38 = vector.shape_cast %37 : vector<1x128x128xbf16> to vector<128x128xbf16>
    %cst_43 = arith.constant dense<0.000000e+00> : vector<64x128xf32>
    %39 = tpu.matmul %36, %38, %cst_43 {dimension_numbers = #tpu.dot_dimension_numbers<[1], [0], [0], [1], [0, 0, 1, 1], [], []>} : vector<64x128xbf16>, vector<128x128xbf16>, vector<64x128xf32> -> vector<64x128xf32>
    %40 = arith.addf %34, %39 : vector<64x128xf32>
    %c0_44 = arith.constant 0 : index
    %c0_45 = arith.constant 0 : index
    %c33 = arith.constant 33 : index
    %c0_46 = arith.constant 0 : index
    %41 = vector.load %arg4[%c0_44, %c0_45, %c33, %c0_46] : memref<1x1x112x128xbf16, #tpu.memory_space<vmem>>, vector<1x1x64x128xbf16>
    %42 = vector.shape_cast %41 : vector<1x1x64x128xbf16> to vector<64x128xbf16>
    %c7 = arith.constant 7 : index
    %c0_47 = arith.constant 0 : index
    %c0_48 = arith.constant 0 : index
    %43 = vector.load %arg5[%c7, %c0_47, %c0_48] : memref<9x128x128xbf16, #tpu.memory_space<vmem>>, vector<1x128x128xbf16>
    %44 = vector.shape_cast %43 : vector<1x128x128xbf16> to vector<128x128xbf16>
    %cst_49 = arith.constant dense<0.000000e+00> : vector<64x128xf32>
    %45 = tpu.matmul %42, %44, %cst_49 {dimension_numbers = #tpu.dot_dimension_numbers<[1], [0], [0], [1], [0, 0, 1, 1], [], []>} : vector<64x128xbf16>, vector<128x128xbf16>, vector<64x128xf32> -> vector<64x128xf32>
    %46 = arith.addf %40, %45 : vector<64x128xf32>
    %c0_50 = arith.constant 0 : index
    %c0_51 = arith.constant 0 : index
    %c34 = arith.constant 34 : index
    %c0_52 = arith.constant 0 : index
    %47 = vector.load %arg4[%c0_50, %c0_51, %c34, %c0_52] : memref<1x1x112x128xbf16, #tpu.memory_space<vmem>>, vector<1x1x64x128xbf16>
    %48 = vector.shape_cast %47 : vector<1x1x64x128xbf16> to vector<64x128xbf16>
    %c8 = arith.constant 8 : index
    %c0_53 = arith.constant 0 : index
    %c0_54 = arith.constant 0 : index
    %49 = vector.load %arg5[%c8, %c0_53, %c0_54] : memref<9x128x128xbf16, #tpu.memory_space<vmem>>, vector<1x128x128xbf16>
    %50 = vector.shape_cast %49 : vector<1x128x128xbf16> to vector<128x128xbf16>
    %cst_55 = arith.constant dense<0.000000e+00> : vector<64x128xf32>
    %51 = tpu.matmul %48, %50, %cst_55 {dimension_numbers = #tpu.dot_dimension_numbers<[1], [0], [0], [1], [0, 0, 1, 1], [], []>} : vector<64x128xbf16>, vector<128x128xbf16>, vector<64x128xf32> -> vector<64x128xf32>
    %52 = arith.addf %46, %51 : vector<64x128xf32>
    %c0_56 = arith.constant 0 : index
    %c0_57 = arith.constant 0 : index
    %53 = vector.load %arg6[%c0_56, %c0_57] : memref<1x128xf32, #tpu.memory_space<vmem>>, vector<1x128xf32>
    %54 = vector.broadcast %53 : vector<1x128xf32> to vector<64x128xf32>
    %55 = arith.addf %52, %54 : vector<64x128xf32>
    %cst_58 = arith.constant 0.000000e+00 : f32
    %56 = vector.broadcast %cst_58 : f32 to vector<64x128xf32>
    %57 = arith.maximumf %55, %56 : vector<64x128xf32>
    %c0_59 = arith.constant 0 : index
    %c0_60 = arith.constant 0 : index
    %c0_61 = arith.constant 0 : index
    %c0_62 = arith.constant 0 : index
    %58 = vector.load %arg7[%c0_59, %c0_60, %c0_61, %c0_62] : memref<1x1x64x128xf32, #tpu.memory_space<vmem>>, vector<1x1x64x128xf32>
    %59 = vector.shape_cast %58 : vector<1x1x64x128xf32> to vector<64x128xf32>
    %60 = vector.shape_cast %57 : vector<64x128xf32> to vector<1x1x64x128xf32>
    tpu.vector_store %arg7[%c0_59, %c0_60, %c0_61, %c0_62], %60 {strides = array<i32>} : memref<1x1x64x128xf32, #tpu.memory_space<vmem>>, vector<1x1x64x128xf32>,
    return
  }
  func.func @transform_0(%arg0: i32, %arg1: i32, %arg2: i32, %arg3: i32) -> (i32, i32, i32, i32) {
    %c0_i32 = arith.constant 0 : i32
    %c0_i32_0 = arith.constant 0 : i32
    return %arg0, %arg1, %c0_i32, %arg3 : i32, i32, i32, i32
  }
  func.func @transform_1(%arg0: i32, %arg1: i32, %arg2: i32, %arg3: i32) -> (i32, i32, i32) {
    %c0_i32 = arith.constant 0 : i32
    %c0_i32_0 = arith.constant 0 : i32
    return %c0_i32, %arg3, %arg2 : i32, i32, i32
  }
  func.func @transform_2(%arg0: i32, %arg1: i32, %arg2: i32, %arg3: i32) -> (i32, i32) {
    %c0_i32 = arith.constant 0 : i32
    %c0_i32_0 = arith.constant 0 : i32
    return %c0_i32, %arg2 : i32, i32
  }
  func.func @transform_3(%arg0: i32, %arg1: i32, %arg2: i32, %arg3: i32) -> (i32, i32, i32, i32) {
    %c0_i32 = arith.constant 0 : i32
    %c0_i32_0 = arith.constant 0 : i32
    return %arg0, %arg1, %c0_i32, %arg2 : i32, i32, i32, i32
  }
}

</mosaic_0001>

<llo_original>
// kernel: tpu_custom_call.1
$region0: #{tpu_custom_call.1}
  #allocation0 [shape = 'u32[]', space=smem, size = 0x4, offset = 0x4, fixed_abs, tag = 'smem constant byte address 0x4 - core index']
  #allocation1 [shape = 'u32[144,128]{1,0:T(1,128)}', space=vmem, size = 0x12000, scoped, tag = 'internal scratch']
  %s0 = inlined_call_operand.hbm [shape: bf16[1,2,112,128], index: 0, kind: input, shape index: {}]
  %s1 = inlined_call_operand.hbm [shape: bf16[9,128,128], index: 1, kind: input, shape index: {}]
  %s2 = inlined_call_operand.vmem [shape: f32[1,128], index: 2, kind: input, shape index: {}]
  %s3 = inlined_call_operand.hbm [shape: f32[1,2,64,128], index: 3, kind: output, shape index: {}]
  %s4 = sld [smem:[#allocation0]]
  $region53: #{tpu_custom_call.1} parent=0
    _
  %s6 = ssub.s32 1, %s4
  %s7 = scalar_select 0, %s6, %s4
  $region1: #{tpu_custom_call.1} parent=0
    #allocation2 [shape = 'u8[57344]{0}', space=vmem, size = 0xe000, scoped, tag = 'input window, operand 0']
    #allocation3 [shape = 's32[2]{0}', space=sflag, size = 0x8, scoped, tag = 'scoped memory for tpu_custom_call.1']
    #allocation4 [shape = 's32[2]{0}', space=sflag, size = 0x8, scoped, tag = 'scoped memory for tpu_custom_call.1']
    #allocation5 [shape = 'u8[294912]{0}', space=vmem, size = 0x48000, scoped, tag = 'input window, operand 1, single buffered']
    #allocation6 [shape = 's32[1]{0}', space=sflag, size = 0x4, scoped, tag = 'scoped memory for tpu_custom_call.1']
    #allocation7 [shape = 'u8[65536]{0}', space=vmem, size = 0x10000, scoped, tag = 'output window, operand 0']
    %8 = vsyncpa [#allocation3], 0
    %s9 = scalar_lea.sflag [#allocation3], 1
    %10 = vsyncpa %s9, 0
    %11 = vsyncpa [#allocation6], 0
    %12 = vsyncpa [#allocation4], 0
    %s13 = scalar_lea.sflag [#allocation4], 1
    %14 = vsyncpa %s13, 0
    loop: start=0, step=1, limit=4
    $region2: #{tpu_custom_call.1} parent=1 // loop_pre_header
      _
    $region3: #{tpu_custom_call.1} parent=1 // loop_header
      %s16 = sphi 0, %s20
      %p17 = scmp.ge.s32.totalorder %s16, 4
      %s23 = sphi 0, %s49
      %s24 = sphi 0, %s45
      %s25 = sphi 0, %s41
      %s26 = sphi 0, %s37
      %s27 = sphi 0, %s23
      %s28 = sphi 0, %s24
      %s29 = sphi 0, %s25
      %s30 = sphi 0, %s26
      %s31 = sphi 0, %s27
      %s32 = sphi 0, %s28
      %s33 = sphi 0, %s29
      %s34 = sphi 0, %s30
      %s56 = sphi 0, %s58
      %s59 = sphi 0, %s56
      %s60 = sphi 0, %s59
      %s76 = sphi 0, %s60
      %s84 = sphi 0, %s86
      %s87 = sphi 0, %s84
      %s88 = sphi 0, %s87
      %s104 = sphi 0, %s88
      %s110 = sphi 0, %s112
      %s113 = sphi 0, %s110
      %s114 = sphi 0, %s113
      %s130 = sphi 0, %s114
      %s140 = sphi 0, %s142
      %s143 = sphi 0, %s140
      %s144 = sphi 0, %s143
      %s160 = sphi 0, %s144
    $region4: #{tpu_custom_call.1} parent=1 // loop_header_branch
      %19 = sbr.rel (%p17) target = $region8
    $region5: #{tpu_custom_call.1} parent=1 // loop_body
      %s21 = ssub.s32 %s16, 1
      %s22 = ssub.s32 %s16, 2
      %s35 = sadd.s32 1, %s26
      %p36 = scmp.ge.s32.totalorder %s35, 1
      %s37 = scalar_select %p36, 0, %s35
      %s38 = sadd.s32 1, %s25
      %s39 = scalar_select %p36, %s38, %s25
      %p40 = scmp.ge.s32.totalorder %s39, 1
      %s41 = scalar_select %p40, 0, %s39
      %s42 = sadd.s32 1, %s24
      %s43 = scalar_select %p40, %s42, %s24
      %p44 = scmp.ge.s32.totalorder %s43, 2
      %s45 = scalar_select %p44, 0, %s43
      %s46 = sadd.s32 1, %s23
      %s47 = scalar_select %p44, %s46, %s23
      %p48 = scmp.ge.s32.totalorder %s47, 1
      %s49 = scalar_select %p48, 0, %s47
      %s50 = ssub.s32 %s23, %s49
      %s51 = ssub.s32 %s24, %s45
      %s52 = sor.u32 %s50, %s51
      %s53 = ssub.s32 %s26, %s37
      %s54 = sor.u32 %s52, %s53
      %p55 = scmp.eq.s32.totalorder %s54, 0
      %s57 = sadd.s32 %s56, 1
      %s58 = scalar_select %p55, %s56, %s57
      %p61 = pneg %p55
      %p62 = scmp.eq.s32.totalorder %s16, 1
      %p63 = por %p61, %p62
      %p64 = scmp.ne.s32.totalorder %s56, %s59
      %p65 = scmp.eq.s32.totalorder %s16, 0
      %p66 = por %p64, %p65
      %p67 = scmp.ne.s32.totalorder %s56, %s59
      %p68 = scmp.eq.s32.totalorder %s21, 1
      %p69 = por %p67, %p68
      %p70 = scmp.ne.s32.totalorder %s59, %s60
      %p71 = scmp.eq.s32.totalorder %s21, 0
      %p72 = por %p70, %p71
      %p73 = scmp.ne.s32.totalorder %s59, %s60
      %p74 = scmp.eq.s32.totalorder %s22, 1
      %p75 = por %p73, %p74
      %p77 = scmp.ne.s32.totalorder %s60, %s76
      %p78 = scmp.eq.s32.totalorder %s22, 0
      %p79 = por %p77, %p78
      %s80 = ssub.s32 %s26, %s37
      %s81 = ssub.s32 %s25, %s41
      %s82 = sor.u32 %s80, %s81
      %p83 = scmp.eq.s32.totalorder %s82, 0
      %s85 = sadd.s32 %s84, 1
      %s86 = scalar_select %p83, %s84, %s85
      %p89 = pneg %p83
      %p90 = scmp.eq.s32.totalorder %s16, 1
      %p91 = por %p89, %p90
      %p92 = scmp.ne.s32.totalorder %s84, %s87
      %p93 = scmp.eq.s32.totalorder %s16, 0
      %p94 = por %p92, %p93
      %p95 = scmp.ne.s32.totalorder %s84, %s87
      %p96 = scmp.eq.s32.totalorder %s21, 1
      %p97 = por %p95, %p96
      %p98 = scmp.ne.s32.totalorder %s87, %s88
      %p99 = scmp.eq.s32.totalorder %s21, 0
      %p100 = por %p98, %p99
      %p101 = scmp.ne.s32.totalorder %s87, %s88
      %p102 = scmp.eq.s32.totalorder %s22, 1
      %p103 = por %p101, %p102
      %p105 = scmp.ne.s32.totalorder %s88, %s104
      %p106 = scmp.eq.s32.totalorder %s22, 0
      %p107 = por %p105, %p106
      %s108 = ssub.s32 %s25, %s41
      %p109 = scmp.eq.s32.totalorder %s108, 0
      %s111 = sadd.s32 %s110, 1
      %s112 = scalar_select %p109, %s110, %s111
      %p115 = pneg %p109
      %p116 = scmp.eq.s32.totalorder %s16, 1
      %p117 = por %p115, %p116
      %p118 = scmp.ne.s32.totalorder %s110, %s113
      %p119 = scmp.eq.s32.totalorder %s16, 0
      %p120 = por %p118, %p119
      %p121 = scmp.ne.s32.totalorder %s110, %s113
      %p122 = scmp.eq.s32.totalorder %s21, 1
      %p123 = por %p121, %p122
      %p124 = scmp.ne.s32.totalorder %s113, %s114
      %p125 = scmp.eq.s32.totalorder %s21, 0
      %p126 = por %p124, %p125
      %p127 = scmp.ne.s32.totalorder %s113, %s114
      %p128 = scmp.eq.s32.totalorder %s22, 1
      %p129 = por %p127, %p128
      %p131 = scmp.ne.s32.totalorder %s114, %s130
      %p132 = scmp.eq.s32.totalorder %s22, 0
      %p133 = por %p131, %p132
      %s134 = ssub.s32 %s23, %s49
      %s135 = ssub.s32 %s24, %s45
      %s136 = sor.u32 %s134, %s135
      %s137 = ssub.s32 %s25, %s41
      %s138 = sor.u32 %s136, %s137
      %p139 = scmp.eq.s32.totalorder %s138, 0
      %s141 = sadd.s32 %s140, 1
      %s142 = scalar_select %p139, %s140, %s141
      %p145 = pneg %p139
      %p146 = scmp.eq.s32.totalorder %s16, 1
      %p147 = por %p145, %p146
      %p148 = scmp.ne.s32.totalorder %s140, %s143
      %p149 = scmp.eq.s32.totalorder %s16, 0
      %p150 = por %p148, %p149
      %p151 = scmp.ne.s32.totalorder %s140, %s143
      %p152 = scmp.eq.s32.totalorder %s21, 1
      %p153 = por %p151, %p152
      %p154 = scmp.ne.s32.totalorder %s143, %s144
      %p155 = scmp.eq.s32.totalorder %s21, 0
      %p156 = por %p154, %p155
      %p157 = scmp.ne.s32.totalorder %s143, %s144
      %p158 = scmp.eq.s32.totalorder %s22, 1
      %p159 = por %p157, %p158
      %p161 = scmp.ne.s32.totalorder %s144, %s160
      %p162 = scmp.eq.s32.totalorder %s22, 0
      %p163 = por %p161, %p162
      %p164 = scmp.le.s32.totalorder 1, %s16
      %p165 = scmp.lt.s32.totalorder %s16, 3
      %p166 = pnand %p164, %p165
      %p167 = pneg %p166
      // Predicated region
      $region9: #{tpu_custom_call.1} parent=5 // pred_check
        _
      $region10: #{tpu_custom_call.1} parent=5 // pred_check_branch
        %169 = sbr.rel (%p166) target = $region12
      $region11: #{tpu_custom_call.1} parent=5 // pred_region
        %s170 = ssub.s32 %s16, 1
        // Predicated region
        $region13: #{tpu_custom_call.1} parent=11 // pred_check
          %p171 = pneg %p100
        $region14: #{tpu_custom_call.1} parent=11 // pred_check_branch
          %173 = sbr.rel (%p171) target = $region16
        $region15: #{tpu_custom_call.1} parent=11 // pred_region
          %s174 = smul.u32 16, %s30
          %s176 = ssub.s32 9216, 9216
          %177 = vsyncadd [#allocation6], %s176
          %s178 = sadd.s32 %s29, %s174
          %s179 = smul.addr %s178, 64
          %s180 = scalar_lea.hbm %s1, %s179
          %s181 = sshll.u32 [#allocation5], 4
          %s182 = int_to_ptr.vmem [resolvable:$true] %s181
          %187 = dma.hbm_to_vmem [thread:$0]  %s180, 9216, %s182, [#allocation6], 64, 64, 4
        $region16: #{tpu_custom_call.1} parent=11 // pred_fallthru
          _
        // Predicated region
        $region17: #{tpu_custom_call.1} parent=11 // pred_check
          %p188 = pneg %p126
        $region18: #{tpu_custom_call.1} parent=11 // pred_check_branch
          %190 = sbr.rel (%p188) target = $region20
        $region19: #{tpu_custom_call.1} parent=11 // pred_region
          %p191 = scmp.lt.s32.totalorder %s29, 0
          %s192 = scalar_select %p191, %s29, 0
          %s193 = scalar_lea.vmem %s2, %s192
        $region20: #{tpu_custom_call.1} parent=11 // pred_fallthru
          _
      $region12: #{tpu_custom_call.1} parent=5 // pred_fallthru
        _
      %p194 = scmp.lt.s32.totalorder %s16, 2
      // Predicated region
      $region21: #{tpu_custom_call.1} parent=5 // pred_check
        %p195 = pneg %p194
      $region22: #{tpu_custom_call.1} parent=5 // pred_check_branch
        %197 = sbr.rel (%p195) target = $region24
      $region23: #{tpu_custom_call.1} parent=5 // pred_region
        // Predicated region
        $region25: #{tpu_custom_call.1} parent=23 // pred_check
          %p198 = pneg %p66
        $region26: #{tpu_custom_call.1} parent=23 // pred_check_branch
          %200 = sbr.rel (%p198) target = $region28
        $region27: #{tpu_custom_call.1} parent=23 // pred_region
          %s201 = sand.u32 %s56, 1
          %s202 = scalar_lea.sflag [#allocation3], %s201
          %s203 = sand.u32 %s56, 1
          %s204 = smul.addr %s203, 56
          %s205 = scalar_lea.vmem [#allocation2], %s204
          %s207 = ssub.s32 896, 896
          %208 = vsyncadd %s202, %s207
          %s209 = smul.addr %s24, 14
          %s210 = sadd.s32 %s26, %s209
          %s211 = smul.addr %s23, 28
          %s212 = sadd.s32 %s210, %s211
          %s213 = smul.addr %s212, 64
          %s214 = scalar_lea.hbm %s0, %s213
          %s215 = sshll.u32 %s205, 4
          %s216 = int_to_ptr.vmem [resolvable:$true] %s215
          %221 = dma.hbm_to_vmem [thread:$0]  %s214, 896, %s216, %s202, 64, 64, 4
        $region28: #{tpu_custom_call.1} parent=23 // pred_fallthru
          _
      $region24: #{tpu_custom_call.1} parent=5 // pred_fallthru
        _
      %p222 = scmp.le.s32.totalorder 1, %s16
      %p223 = scmp.lt.s32.totalorder %s16, 3
      %p224 = pnand %p222, %p223
      %p225 = pneg %p224
      // Predicated region
      $region29: #{tpu_custom_call.1} parent=5 // pred_check
        _
      $region30: #{tpu_custom_call.1} parent=5 // pred_check_branch
        %227 = sbr.rel (%p224) target = $region32
      $region31: #{tpu_custom_call.1} parent=5 // pred_region
        %s228 = ssub.s32 %s16, 1
        %s229 = sand.u32 %s59, 1
        %s230 = scalar_lea.sflag [#allocation3], %s229
        %s231 = sand.u32 %s59, 1
        %s232 = smul.addr %s231, 56
        %s233 = scalar_lea.vmem [#allocation2], %s232
        // Predicated region
        $region33: #{tpu_custom_call.1} parent=31 // pred_check
          %p234 = pneg %p72
        $region34: #{tpu_custom_call.1} parent=31 // pred_check_branch
          %236 = sbr.rel (%p234) target = $region36
        $region35: #{tpu_custom_call.1} parent=31 // pred_region
          %237 = dma.done %s230, 896
        $region36: #{tpu_custom_call.1} parent=31 // pred_fallthru
          _
        // Predicated region
        $region37: #{tpu_custom_call.1} parent=31 // pred_check
          %p238 = pneg %p100
        $region38: #{tpu_custom_call.1} parent=31 // pred_check_branch
          %240 = sbr.rel (%p238) target = $region40
        $region39: #{tpu_custom_call.1} parent=31 // pred_region
          %241 = dma.done [#allocation6], 9216
        $region40: #{tpu_custom_call.1} parent=31 // pred_fallthru
          _
        %s242 = sand.u32 %s59, 1
        %s243 = scalar_lea.sflag [#allocation3], %s242
        %s244 = sand.u32 %s59, 1
        %s245 = smul.addr %s244, 56
        %s246 = scalar_lea.vmem [#allocation2], %s245
        %p247 = pneg %p72
        %p248 = pneg %p69
        %p249 = pneg %p100
        %p250 = pneg %p97
        %p251 = scmp.lt.s32.totalorder %s29, 0
        %s252 = scalar_select %p251, %s29, 0
        %s253 = scalar_lea.vmem %s2, %s252
        %p254 = pneg %p126
        %p255 = pneg %p123
        %p256 = pneg %p156
        %p257 = pneg %p153
        %s258 = sand.u32 %s143, 1
        %s259 = scalar_lea.sflag [#allocation4], %s258
        %s260 = sand.u32 %s143, 1
        %s261 = smul.addr %s260, 64
        %s262 = scalar_lea.vmem [#allocation7], %s261
        %s263 = smul.u32 16, %s30
        %p264 = scmp.lt.s32.totalorder %s29, 0
        %s265 = scalar_select %p264, %s29, 0
        %s266 = scalar_lea.vmem %s2, %s265
        %v268 = vld [vmem:[%s233] sm:$0xf]
        %v269 = vld [vmem:[%s233 + $0x4] sm:$0xf]
        %v270 = vld [vmem:[%s233 + $0x8] sm:$0xf]
        %v271 = vld [vmem:[%s233 + $0xc] sm:$0xf]
        %v272 = vld [vmem:[%s233 + $0x10] sm:$0xf]
        %v273 = vld [vmem:[%s233 + $0x14] sm:$0xf]
        %v274 = vld [vmem:[%s233 + $0x18] sm:$0xf]
        %v275 = vld [vmem:[%s233 + $0x1c] sm:$0xf]
        %v276 = vld [vmem:[#allocation5] sm:$0xf]
        %v277 = vld [vmem:[#allocation5 + $0x4] sm:$0xf]
        %v278 = vld [vmem:[#allocation5 + $0x8] sm:$0xf]
        %v279 = vld [vmem:[#allocation5 + $0xc] sm:$0xf]
        %v280 = vld [vmem:[#allocation5 + $0x10] sm:$0xf]
        %v281 = vld [vmem:[#allocation5 + $0x14] sm:$0xf]
        %v282 = vld [vmem:[#allocation5 + $0x18] sm:$0xf]
        %v283 = vld [vmem:[#allocation5 + $0x1c] sm:$0xf]
        %v284 = vld [vmem:[#allocation5 + $0x20] sm:$0xf]
        %v285 = vld [vmem:[#allocation5 + $0x24] sm:$0xf]
        %v286 = vld [vmem:[#allocation5 + $0x28] sm:$0xf]
        %v287 = vld [vmem:[#allocation5 + $0x2c] sm:$0xf]
        %v288 = vld [vmem:[#allocation5 + $0x30] sm:$0xf]
        %v289 = vld [vmem:[#allocation5 + $0x34] sm:$0xf]
        %v290 = vld [vmem:[#allocation5 + $0x38] sm:$0xf]
        %v291 = vld [vmem:[#allocation5 + $0x3c] sm:$0xf]
        %v292 = vld [vmem:[%s233 + $0x20] sm:$0x1]
        %s293 = scalar_lea.vmem [#allocation5], 64
        %v294 = vld [vmem:[%s293] sm:$0xf]
        %v295 = vld [vmem:[%s293 + $0x4] sm:$0xf]
        %v296 = vld [vmem:[%s293 + $0x8] sm:$0xf]
        %v297 = vld [vmem:[%s293 + $0xc] sm:$0xf]
        %v298 = vld [vmem:[%s293 + $0x10] sm:$0xf]
        %v299 = vld [vmem:[%s293 + $0x14] sm:$0xf]
        %v300 = vld [vmem:[%s293 + $0x18] sm:$0xf]
        %v301 = vld [vmem:[%s293 + $0x1c] sm:$0xf]
        %v302 = vld [vmem:[%s293 + $0x20] sm:$0xf]
        %v303 = vld [vmem:[%s293 + $0x24] sm:$0xf]
        %v304 = vld [vmem:[%s293 + $0x28] sm:$0xf]
        %v305 = vld [vmem:[%s293 + $0x2c] sm:$0xf]
        %v306 = vld [vmem:[%s293 + $0x30] sm:$0xf]
        %v307 = vld [vmem:[%s293 + $0x34] sm:$0xf]
        %v308 = vld [vmem:[%s293 + $0x38] sm:$0xf]
        %v309 = vld [vmem:[%s293 + $0x3c] sm:$0xf]
        %v319 = vunpack.c.l.b16 %v268
        %v320 = vunpack.c.l.b16 %v269
        %v321 = vunpack.c.l.b16 %v270
        %v322 = vunpack.c.l.b16 %v271
        %v323 = vunpack.c.l.b16 %v272
        %v324 = vunpack.c.l.b16 %v273
        %v325 = vunpack.c.l.b16 %v274
        %v326 = vunpack.c.l.b16 %v275
        %v327 = vunpack.c.l.b16 %v292
        %v328 = vpack.c.b16 %v320, %v319
        %v329 = vpack.c.b16 %v322, %v321
        %v330 = vpack.c.b16 %v324, %v323
        %v331 = vpack.c.b16 %v326, %v325
        %v332 = vpack.c.b16 %v327, %v327
        %vm333 = vsmask.f32 7424
        %v335 = vshrl.u32 %v328, 16
        %v337 = vshll.u32 %v328, 16
        %v339 = vrot.slane %v337, 1
        %v340 = vor.u32 %v335, %v339
        %v342 = vshll.u32 %v329, 16
        %v344 = vrot.slane %v342, 1
        %v345 = vsel %vm333, %v340, %v344
        %v346 = vshrl.u32 %v329, 16
        %v348 = vor.u32 %v346, %v344
        %v350 = vshll.u32 %v330, 16
        %v352 = vrot.slane %v350, 1
        %v353 = vsel %vm333, %v348, %v352
        %v354 = vshrl.u32 %v330, 16
        %v356 = vor.u32 %v354, %v352
        %v358 = vshll.u32 %v331, 16
        %v360 = vrot.slane %v358, 1
        %v361 = vsel %vm333, %v356, %v360
        %v362 = vshrl.u32 %v331, 16
        %v364 = vor.u32 %v362, %v360
        %v366 = vshll.u32 %v332, 16
        %v368 = vrot.slane %v366, 1
        %v369 = vsel %vm333, %v364, %v368
        %v390 = vunpack.c.l.b16 %v294
        %v391 = vunpack.c.l.b16 %v295
        %v392 = vunpack.c.l.b16 %v296
        %v393 = vunpack.c.l.b16 %v297
        %v394 = vunpack.c.l.b16 %v298
        %v395 = vunpack.c.l.b16 %v299
        %v396 = vunpack.c.l.b16 %v300
        %v397 = vunpack.c.l.b16 %v301
        %v398 = vunpack.c.l.b16 %v302
        %v399 = vunpack.c.l.b16 %v303
        %v400 = vunpack.c.l.b16 %v304
        %v401 = vunpack.c.l.b16 %v305
        %v402 = vunpack.c.l.b16 %v306
        %v403 = vunpack.c.l.b16 %v307
        %v404 = vunpack.c.l.b16 %v308
        %v405 = vunpack.c.l.b16 %v309
        %v406 = vpack.c.b16 %v391, %v390
        %v407 = vpack.c.b16 %v393, %v392
        %v408 = vpack.c.b16 %v395, %v394
        %v409 = vpack.c.b16 %v397, %v396
        %v410 = vpack.c.b16 %v399, %v398
        %v411 = vpack.c.b16 %v401, %v400
        %v412 = vpack.c.b16 %v403, %v402
        %v413 = vpack.c.b16 %v405, %v404
        %422 = vmatprep.subr.bf16.mxu0 0
        %423 = vmatpush1.bf16.msra.mxu0 %v406
        %424 = vmatprep.subr.bf16.mxu0 0
        %425 = vmatpush1.bf16.msra.mxu0 %v407
        %426 = vmatprep.subr.bf16.mxu0 0
        %427 = vmatpush1.bf16.msra.mxu0 %v408
        %428 = vmatprep.subr.bf16.mxu0 0
        %429 = vmatpush1.bf16.msra.mxu0 %v409
        %430 = vmatprep.subr.bf16.mxu0 0
        %431 = vmatpush1.bf16.msra.mxu0 %v410
        %432 = vmatprep.subr.bf16.mxu0 0
        %433 = vmatpush1.bf16.msra.mxu0 %v411
        %434 = vmatprep.subr.bf16.mxu0 0
        %435 = vmatpush1.bf16.msra.mxu0 %v412
        %436 = vmatprep.subr.bf16.mxu0 0
        %437 = vmatpush1.bf16.msra.mxu0 %v413
        %438 = vmatprep.subr.bf16.mxu0 0
        %439 = vmatpush1.bf16.msra.mxu0 0
        %440 = vmatprep.subr.bf16.mxu0 0
        %441 = vmatpush1.bf16.msra.mxu0 0
        %442 = vmatprep.subr.bf16.mxu0 0
        %443 = vmatpush1.bf16.msra.mxu0 0
        %444 = vmatprep.subr.bf16.mxu0 0
        %445 = vmatpush1.bf16.msra.mxu0 0
        %446 = vmatprep.subr.bf16.mxu0 0
        %447 = vmatpush1.bf16.msra.mxu0 0
        %448 = vmatprep.subr.bf16.mxu0 0
        %449 = vmatpush1.bf16.msra.mxu0 0
        %450 = vmatprep.subr.bf16.mxu0 0
        %451 = vmatpush1.bf16.msra.mxu0 0
        %452 = vmatprep.subr.bf16.mxu0 0
        %453 = vmatpush1.bf16.msra.mxu0 0
        %454 = vmatprep.mubr.bf16.mxu0 0
        %455 = vmatmul.mubr.bf16.gmra.mrb[0].mxu0 %v345
        %v456 = vpop.f32.mrb[0].mxu0
        %v457 = vadd.f32 0.0, %v456
        %v458 = vpop.f32.mrb[0].mxu0
        %v459 = vpop.f32.mrb[0].mxu0
        %v460 = vadd.f32 0.0, %v459
        %v461 = vpop.f32.mrb[0].mxu0
        %462 = vmatprep.mubr.bf16.mxu0 0
        %463 = vmatmul.mubr.bf16.gmra.mrb[0].mxu0 %v353
        %v464 = vpop.f32.mrb[0].mxu0
        %v465 = vadd.f32 0.0, %v464
        %v466 = vpop.f32.mrb[0].mxu0
        %v467 = vpop.f32.mrb[0].mxu0
        %v468 = vadd.f32 0.0, %v467
        %v469 = vpop.f32.mrb[0].mxu0
        %470 = vmatprep.mubr.bf16.mxu0 0
        %471 = vmatmul.mubr.bf16.gmra.mrb[0].mxu0 %v361
        %v472 = vpop.f32.mrb[0].mxu0
        %v473 = vadd.f32 0.0, %v472
        %v474 = vpop.f32.mrb[0].mxu0
        %v475 = vpop.f32.mrb[0].mxu0
        %v476 = vadd.f32 0.0, %v475
        %v477 = vpop.f32.mrb[0].mxu0
        %478 = vmatprep.mubr.bf16.mxu0 0
        %479 = vmatmul.mubr.bf16.gmra.mrb[0].mxu0 %v369
        %v480 = vpop.f32.mrb[0].mxu0
        %v481 = vadd.f32 0.0, %v480
        %v482 = vpop.f32.mrb[0].mxu0
        %v483 = vpop.f32.mrb[0].mxu0
        %v484 = vadd.f32 0.0, %v483
        %v485 = vpop.f32.mrb[0].mxu0
        %486 = vdwg.mxu0
        %v507 = vunpack.c.l.b16 %v276
        %v508 = vunpack.c.l.b16 %v277
        %v509 = vunpack.c.l.b16 %v278
        %v510 = vunpack.c.l.b16 %v279
        %v511 = vunpack.c.l.b16 %v280
        %v512 = vunpack.c.l.b16 %v281
        %v513 = vunpack.c.l.b16 %v282
        %v514 = vunpack.c.l.b16 %v283
        %v515 = vunpack.c.l.b16 %v284
        %v516 = vunpack.c.l.b16 %v285
        %v517 = vunpack.c.l.b16 %v286
        %v518 = vunpack.c.l.b16 %v287
        %v519 = vunpack.c.l.b16 %v288
        %v520 = vunpack.c.l.b16 %v289
        %v521 = vunpack.c.l.b16 %v290
        %v522 = vunpack.c.l.b16 %v291
        %v523 = vpack.c.b16 %v508, %v507
        %v524 = vpack.c.b16 %v510, %v509
        %v525 = vpack.c.b16 %v512, %v511
        %v526 = vpack.c.b16 %v514, %v513
        %v527 = vpack.c.b16 %v516, %v515
        %v528 = vpack.c.b16 %v518, %v517
        %v529 = vpack.c.b16 %v520, %v519
        %v530 = vpack.c.b16 %v522, %v521
        %539 = vmatprep.subr.bf16.mxu0 0
        %540 = vmatpush1.bf16.msra.mxu0 %v523
        %541 = vmatprep.subr.bf16.mxu0 0
        %542 = vmatpush1.bf16.msra.mxu0 %v524
        %543 = vmatprep.subr.bf16.mxu0 0
        %544 = vmatpush1.bf16.msra.mxu0 %v525
        %545 = vmatprep.subr.bf16.mxu0 0
        %546 = vmatpush1.bf16.msra.mxu0 %v526
        %547 = vmatprep.subr.bf16.mxu0 0
        %548 = vmatpush1.bf16.msra.mxu0 %v527
        %549 = vmatprep.subr.bf16.mxu0 0
        %550 = vmatpush1.bf16.msra.mxu0 %v528
        %551 = vmatprep.subr.bf16.mxu0 0
        %552 = vmatpush1.bf16.msra.mxu0 %v529
        %553 = vmatprep.subr.bf16.mxu0 0
        %554 = vmatpush1.bf16.msra.mxu0 %v530
        %555 = vmatprep.subr.bf16.mxu0 0
        %556 = vmatpush1.bf16.msra.mxu0 0
        %557 = vmatprep.subr.bf16.mxu0 0
        %558 = vmatpush1.bf16.msra.mxu0 0
        %559 = vmatprep.subr.bf16.mxu0 0
        %560 = vmatpush1.bf16.msra.mxu0 0
        %561 = vmatprep.subr.bf16.mxu0 0
        %562 = vmatpush1.bf16.msra.mxu0 0
        %563 = vmatprep.subr.bf16.mxu0 0
        %564 = vmatpush1.bf16.msra.mxu0 0
        %565 = vmatprep.subr.bf16.mxu0 0
        %566 = vmatpush1.bf16.msra.mxu0 0
        %567 = vmatprep.subr.bf16.mxu0 0
        %568 = vmatpush1.bf16.msra.mxu0 0
        %569 = vmatprep.subr.bf16.mxu0 0
        %570 = vmatpush1.bf16.msra.mxu0 0
        %571 = vmatprep.mubr.bf16.mxu0 0
        %572 = vmatmul.mubr.bf16.gmra.mrb[0].mxu0 %v328
        %v573 = vpop.f32.mrb[0].mxu0
        %v574 = vadd.f32 %v457, %v573
        %v575 = vpop.f32.mrb[0].mxu0
        %v576 = vpop.f32.mrb[0].mxu0
        %v577 = vadd.f32 %v460, %v576
        %v578 = vpop.f32.mrb[0].mxu0
        %579 = vmatprep.mubr.bf16.mxu0 0
        %580 = vmatmul.mubr.bf16.gmra.mrb[0].mxu0 %v329
        %v581 = vpop.f32.mrb[0].mxu0
        %v582 = vadd.f32 %v465, %v581
        %v583 = vpop.f32.mrb[0].mxu0
        %v584 = vpop.f32.mrb[0].mxu0
        %v585 = vadd.f32 %v468, %v584
        %v586 = vpop.f32.mrb[0].mxu0
        %587 = vmatprep.mubr.bf16.mxu0 0
        %588 = vmatmul.mubr.bf16.gmra.mrb[0].mxu0 %v330
        %v589 = vpop.f32.mrb[0].mxu0
        %v590 = vadd.f32 %v473, %v589
        %v591 = vpop.f32.mrb[0].mxu0
        %v592 = vpop.f32.mrb[0].mxu0
        %v593 = vadd.f32 %v476, %v592
        %v594 = vpop.f32.mrb[0].mxu0
        %595 = vmatprep.mubr.bf16.mxu0 0
        %596 = vmatmul.mubr.bf16.gmra.mrb[0].mxu0 %v331
        %v597 = vpop.f32.mrb[0].mxu0
        %v598 = vadd.f32 %v481, %v597
        %v599 = vpop.f32.mrb[0].mxu0
        %v600 = vpop.f32.mrb[0].mxu0
        %v601 = vadd.f32 %v484, %v600
        %v602 = vpop.f32.mrb[0].mxu0
        %603 = vdwg.mxu0
        %v604 = vld [vmem:[%s233] sm:$0xe]
        %s605 = scalar_lea.vmem [#allocation5], 128
        %v606 = vld [vmem:[%s605] sm:$0xf]
        %v607 = vld [vmem:[%s605 + $0x4] sm:$0xf]
        %v608 = vld [vmem:[%s605 + $0x8] sm:$0xf]
        %v609 = vld [vmem:[%s605 + $0xc] sm:$0xf]
        %v610 = vld [vmem:[%s605 + $0x10] sm:$0xf]
        %v611 = vld [vmem:[%s605 + $0x14] sm:$0xf]
        %v612 = vld [vmem:[%s605 + $0x18] sm:$0xf]
        %v613 = vld [vmem:[%s605 + $0x1c] sm:$0xf]
        %v614 = vld [vmem:[%s605 + $0x20] sm:$0xf]
        %v615 = vld [vmem:[%s605 + $0x24] sm:$0xf]
        %v616 = vld [vmem:[%s605 + $0x28] sm:$0xf]
        %v617 = vld [vmem:[%s605 + $0x2c] sm:$0xf]
        %v618 = vld [vmem:[%s605 + $0x30] sm:$0xf]
        %v619 = vld [vmem:[%s605 + $0x34] sm:$0xf]
        %v620 = vld [vmem:[%s605 + $0x38] sm:$0xf]
        %v621 = vld [vmem:[%s605 + $0x3c] sm:$0xf]
        %v623 = vunpack.c.l.b16 %v604
        %v624 = vpack.c.b16 %v320, %v623
        %vm625 = vcmask 1046528
        %v626 = vrot.slane %v624, 1
        %v627 = vrot.slane %v329, 1
        %v628 = vsel %vm625, %v626, %v627
        %v629 = vrot.slane %v330, 1
        %v630 = vsel %vm625, %v627, %v629
        %v631 = vrot.slane %v331, 1
        %v632 = vsel %vm625, %v629, %v631
        %v633 = vrot.slane %v332, 1
        %v634 = vsel %vm625, %v631, %v633
        %v655 = vunpack.c.l.b16 %v606
        %v656 = vunpack.c.l.b16 %v607
        %v657 = vunpack.c.l.b16 %v608
        %v658 = vunpack.c.l.b16 %v609
        %v659 = vunpack.c.l.b16 %v610
        %v660 = vunpack.c.l.b16 %v611
        %v661 = vunpack.c.l.b16 %v612
        %v662 = vunpack.c.l.b16 %v613
        %v663 = vunpack.c.l.b16 %v614
        %v664 = vunpack.c.l.b16 %v615
        %v665 = vunpack.c.l.b16 %v616
        %v666 = vunpack.c.l.b16 %v617
        %v667 = vunpack.c.l.b16 %v618
        %v668 = vunpack.c.l.b16 %v619
        %v669 = vunpack.c.l.b16 %v620
        %v670 = vunpack.c.l.b16 %v621
        %v671 = vpack.c.b16 %v656, %v655
        %v672 = vpack.c.b16 %v658, %v657
        %v673 = vpack.c.b16 %v660, %v659
        %v674 = vpack.c.b16 %v662, %v661
        %v675 = vpack.c.b16 %v664, %v663
        %v676 = vpack.c.b16 %v666, %v665
        %v677 = vpack.c.b16 %v668, %v667
        %v678 = vpack.c.b16 %v670, %v669
        %687 = vmatprep.subr.bf16.mxu0 0
        %688 = vmatpush1.bf16.msra.mxu0 %v671
        %689 = vmatprep.subr.bf16.mxu0 0
        %690 = vmatpush1.bf16.msra.mxu0 %v672
        %691 = vmatprep.subr.bf16.mxu0 0
        %692 = vmatpush1.bf16.msra.mxu0 %v673
        %693 = vmatprep.subr.bf16.mxu0 0
        %694 = vmatpush1.bf16.msra.mxu0 %v674
        %695 = vmatprep.subr.bf16.mxu0 0
        %696 = vmatpush1.bf16.msra.mxu0 %v675
        %697 = vmatprep.subr.bf16.mxu0 0
        %698 = vmatpush1.bf16.msra.mxu0 %v676
        %699 = vmatprep.subr.bf16.mxu0 0
        %700 = vmatpush1.bf16.msra.mxu0 %v677
        %701 = vmatprep.subr.bf16.mxu0 0
        %702 = vmatpush1.bf16.msra.mxu0 %v678
        %703 = vmatprep.subr.bf16.mxu0 0
        %704 = vmatpush1.bf16.msra.mxu0 0
        %705 = vmatprep.subr.bf16.mxu0 0
        %706 = vmatpush1.bf16.msra.mxu0 0
        %707 = vmatprep.subr.bf16.mxu0 0
        %708 = vmatpush1.bf16.msra.mxu0 0
        %709 = vmatprep.subr.bf16.mxu0 0
        %710 = vmatpush1.bf16.msra.mxu0 0
        %711 = vmatprep.subr.bf16.mxu0 0
        %712 = vmatpush1.bf16.msra.mxu0 0
        %713 = vmatprep.subr.bf16.mxu0 0
        %714 = vmatpush1.bf16.msra.mxu0 0
        %715 = vmatprep.subr.bf16.mxu0 0
        %716 = vmatpush1.bf16.msra.mxu0 0
        %717 = vmatprep.subr.bf16.mxu0 0
        %718 = vmatpush1.bf16.msra.mxu0 0
        %719 = vmatprep.mubr.bf16.mxu0 0
        %720 = vmatmul.mubr.bf16.gmra.mrb[0].mxu0 %v628
        %v721 = vpop.f32.mrb[0].mxu0
        %v722 = vadd.f32 0.0, %v721
        %v723 = vpop.f32.mrb[0].mxu0
        %v724 = vpop.f32.mrb[0].mxu0
        %v725 = vadd.f32 0.0, %v724
        %v726 = vpop.f32.mrb[0].mxu0
        %727 = vmatprep.mubr.bf16.mxu0 0
        %728 = vmatmul.mubr.bf16.gmra.mrb[0].mxu0 %v630
        %v729 = vpop.f32.mrb[0].mxu0
        %v730 = vadd.f32 0.0, %v729
        %v731 = vpop.f32.mrb[0].mxu0
        %v732 = vpop.f32.mrb[0].mxu0
        %v733 = vadd.f32 0.0, %v732
        %v734 = vpop.f32.mrb[0].mxu0
        %735 = vmatprep.mubr.bf16.mxu0 0
        %736 = vmatmul.mubr.bf16.gmra.mrb[0].mxu0 %v632
        %v737 = vpop.f32.mrb[0].mxu0
        %v738 = vadd.f32 0.0, %v737
        %v739 = vpop.f32.mrb[0].mxu0
        %v740 = vpop.f32.mrb[0].mxu0
        %v741 = vadd.f32 0.0, %v740
        %v742 = vpop.f32.mrb[0].mxu0
        %743 = vmatprep.mubr.bf16.mxu0 0
        %744 = vmatmul.mubr.bf16.gmra.mrb[0].mxu0 %v634
        %v745 = vpop.f32.mrb[0].mxu0
        %v746 = vadd.f32 0.0, %v745
        %v747 = vpop.f32.mrb[0].mxu0
        %v748 = vpop.f32.mrb[0].mxu0
        %v749 = vadd.f32 0.0, %v748
        %v750 = vpop.f32.mrb[0].mxu0
        %751 = vdwg.mxu0
        %v752 = vadd.f32 %v574, %v722
        %v753 = vadd.f32 %v577, %v725
        %v754 = vadd.f32 %v582, %v730
        %v755 = vadd.f32 %v585, %v733
        %v756 = vadd.f32 %v590, %v738
        %v757 = vadd.f32 %v593, %v741
        %v758 = vadd.f32 %v598, %v746
        %v759 = vadd.f32 %v601, %v749
        %v760 = vld [vmem:[%s233 + $0x8] sm:$0xf]
        %v761 = vld [vmem:[%s233 + $0xc] sm:$0xf]
        %v762 = vld [vmem:[%s233 + $0x10] sm:$0xf]
        %v763 = vld [vmem:[%s233 + $0x14] sm:$0xf]
        %v764 = vld [vmem:[%s233 + $0x18] sm:$0xf]
        %v765 = vld [vmem:[%s233 + $0x1c] sm:$0xf]
        %v766 = vld [vmem:[%s233 + $0x20] sm:$0xf]
        %v767 = vld [vmem:[%s233 + $0x24] sm:$0xf]
        %s768 = scalar_lea.vmem [#allocation5], 192
        %v769 = vld [vmem:[%s768] sm:$0xf]
        %v770 = vld [vmem:[%s768 + $0x4] sm:$0xf]
        %v771 = vld [vmem:[%s768 + $0x8] sm:$0xf]
        %v772 = vld [vmem:[%s768 + $0xc] sm:$0xf]
        %v773 = vld [vmem:[%s768 + $0x10] sm:$0xf]
        %v774 = vld [vmem:[%s768 + $0x14] sm:$0xf]
        %v775 = vld [vmem:[%s768 + $0x18] sm:$0xf]
        %v776 = vld [vmem:[%s768 + $0x1c] sm:$0xf]
        %v777 = vld [vmem:[%s768 + $0x20] sm:$0xf]
        %v778 = vld [vmem:[%s768 + $0x24] sm:$0xf]
        %v779 = vld [vmem:[%s768 + $0x28] sm:$0xf]
        %v780 = vld [vmem:[%s768 + $0x2c] sm:$0xf]
        %v781 = vld [vmem:[%s768 + $0x30] sm:$0xf]
        %v782 = vld [vmem:[%s768 + $0x34] sm:$0xf]
        %v783 = vld [vmem:[%s768 + $0x38] sm:$0xf]
        %v784 = vld [vmem:[%s768 + $0x3c] sm:$0xf]
        %v793 = vunpack.c.l.b16 %v760
        %v794 = vunpack.c.l.b16 %v761
        %v795 = vunpack.c.l.b16 %v762
        %v796 = vunpack.c.l.b16 %v763
        %v797 = vunpack.c.l.b16 %v764
        %v798 = vunpack.c.l.b16 %v765
        %v799 = vunpack.c.l.b16 %v766
        %v800 = vunpack.c.l.b16 %v767
        %v801 = vpack.c.b16 %v794, %v793
        %v802 = vpack.c.b16 %v796, %v795
        %v803 = vpack.c.b16 %v798, %v797
        %v804 = vpack.c.b16 %v800, %v799
        %v825 = vunpack.c.l.b16 %v769
        %v826 = vunpack.c.l.b16 %v770
        %v827 = vunpack.c.l.b16 %v771
        %v828 = vunpack.c.l.b16 %v772
        %v829 = vunpack.c.l.b16 %v773
        %v830 = vunpack.c.l.b16 %v774
        %v831 = vunpack.c.l.b16 %v775
        %v832 = vunpack.c.l.b16 %v776
        %v833 = vunpack.c.l.b16 %v777
        %v834 = vunpack.c.l.b16 %v778
        %v835 = vunpack.c.l.b16 %v779
        %v836 = vunpack.c.l.b16 %v780
        %v837 = vunpack.c.l.b16 %v781
        %v838 = vunpack.c.l.b16 %v782
        %v839 = vunpack.c.l.b16 %v783
        %v840 = vunpack.c.l.b16 %v784
        %v841 = vpack.c.b16 %v826, %v825
        %v842 = vpack.c.b16 %v828, %v827
        %v843 = vpack.c.b16 %v830, %v829
        %v844 = vpack.c.b16 %v832, %v831
        %v845 = vpack.c.b16 %v834, %v833
        %v846 = vpack.c.b16 %v836, %v835
        %v847 = vpack.c.b16 %v838, %v837
        %v848 = vpack.c.b16 %v840, %v839
        %857 = vmatprep.subr.bf16.mxu0 0
        %858 = vmatpush1.bf16.msra.mxu0 %v841
        %859 = vmatprep.subr.bf16.mxu0 0
        %860 = vmatpush1.bf16.msra.mxu0 %v842
        %861 = vmatprep.subr.bf16.mxu0 0
        %862 = vmatpush1.bf16.msra.mxu0 %v843
        %863 = vmatprep.subr.bf16.mxu0 0
        %864 = vmatpush1.bf16.msra.mxu0 %v844
        %865 = vmatprep.subr.bf16.mxu0 0
        %866 = vmatpush1.bf16.msra.mxu0 %v845
        %867 = vmatprep.subr.bf16.mxu0 0
        %868 = vmatpush1.bf16.msra.mxu0 %v846
        %869 = vmatprep.subr.bf16.mxu0 0
        %870 = vmatpush1.bf16.msra.mxu0 %v847
        %871 = vmatprep.subr.bf16.mxu0 0
        %872 = vmatpush1.bf16.msra.mxu0 %v848
        %873 = vmatprep.subr.bf16.mxu0 0
        %874 = vmatpush1.bf16.msra.mxu0 0
        %875 = vmatprep.subr.bf16.mxu0 0
        %876 = vmatpush1.bf16.msra.mxu0 0
        %877 = vmatprep.subr.bf16.mxu0 0
        %878 = vmatpush1.bf16.msra.mxu0 0
        %879 = vmatprep.subr.bf16.mxu0 0
        %880 = vmatpush1.bf16.msra.mxu0 0
        %881 = vmatprep.subr.bf16.mxu0 0
        %882 = vmatpush1.bf16.msra.mxu0 0
        %883 = vmatprep.subr.bf16.mxu0 0
        %884 = vmatpush1.bf16.msra.mxu0 0
        %885 = vmatprep.subr.bf16.mxu0 0
        %886 = vmatpush1.bf16.msra.mxu0 0
        %887 = vmatprep.subr.bf16.mxu0 0
        %888 = vmatpush1.bf16.msra.mxu0 0
        %889 = vmatprep.mubr.bf16.mxu0 0
        %890 = vmatmul.mubr.bf16.gmra.mrb[0].mxu0 %v801
        %v891 = vpop.f32.mrb[0].mxu0
        %v892 = vadd.f32 0.0, %v891
        %v893 = vpop.f32.mrb[0].mxu0
        %v894 = vpop.f32.mrb[0].mxu0
        %v895 = vadd.f32 0.0, %v894
        %v896 = vpop.f32.mrb[0].mxu0
        %897 = vmatprep.mubr.bf16.mxu0 0
        %898 = vmatmul.mubr.bf16.gmra.mrb[0].mxu0 %v802
        %v899 = vpop.f32.mrb[0].mxu0
        %v900 = vadd.f32 0.0, %v899
        %v901 = vpop.f32.mrb[0].mxu0
        %v902 = vpop.f32.mrb[0].mxu0
        %v903 = vadd.f32 0.0, %v902
        %v904 = vpop.f32.mrb[0].mxu0
        %905 = vmatprep.mubr.bf16.mxu0 0
        %906 = vmatmul.mubr.bf16.gmra.mrb[0].mxu0 %v803
        %v907 = vpop.f32.mrb[0].mxu0
        %v908 = vadd.f32 0.0, %v907
        %v909 = vpop.f32.mrb[0].mxu0
        %v910 = vpop.f32.mrb[0].mxu0
        %v911 = vadd.f32 0.0, %v910
        %v912 = vpop.f32.mrb[0].mxu0
        %913 = vmatprep.mubr.bf16.mxu0 0
        %914 = vmatmul.mubr.bf16.gmra.mrb[0].mxu0 %v804
        %v915 = vpop.f32.mrb[0].mxu0
        %v916 = vadd.f32 0.0, %v915
        %v917 = vpop.f32.mrb[0].mxu0
        %v918 = vpop.f32.mrb[0].mxu0
        %v919 = vadd.f32 0.0, %v918
        %v920 = vpop.f32.mrb[0].mxu0
        %921 = vdwg.mxu0
        %v922 = vadd.f32 %v752, %v892
        %v923 = vadd.f32 %v753, %v895
        %v924 = vadd.f32 %v754, %v900
        %v925 = vadd.f32 %v755, %v903
        %v926 = vadd.f32 %v756, %v908
        %v927 = vadd.f32 %v757, %v911
        %v928 = vadd.f32 %v758, %v916
        %v929 = vadd.f32 %v759, %v919
        %v930 = vld [vmem:[%s233 + $0x8] sm:$0xf]
        %v931 = vld [vmem:[%s233 + $0xc] sm:$0xf]
        %v932 = vld [vmem:[%s233 + $0x10] sm:$0xf]
        %v933 = vld [vmem:[%s233 + $0x14] sm:$0xf]
        %v934 = vld [vmem:[%s233 + $0x18] sm:$0xf]
        %v935 = vld [vmem:[%s233 + $0x1c] sm:$0xf]
        %v936 = vld [vmem:[%s233 + $0x20] sm:$0xf]
        %v937 = vld [vmem:[%s233 + $0x24] sm:$0xf]
        %v938 = vld [vmem:[%s233 + $0x28] sm:$0x1]
        %s939 = scalar_lea.vmem [#allocation5], 256
        %v940 = vld [vmem:[%s939] sm:$0xf]
        %v941 = vld [vmem:[%s939 + $0x4] sm:$0xf]
        %v942 = vld [vmem:[%s939 + $0x8] sm:$0xf]
        %v943 = vld [vmem:[%s939 + $0xc] sm:$0xf]
        %v944 = vld [vmem:[%s939 + $0x10] sm:$0xf]
        %v945 = vld [vmem:[%s939 + $0x14] sm:$0xf]
        %v946 = vld [vmem:[%s939 + $0x18] sm:$0xf]
        %v947 = vld [vmem:[%s939 + $0x1c] sm:$0xf]
        %v948 = vld [vmem:[%s939 + $0x20] sm:$0xf]
        %v949 = vld [vmem:[%s939 + $0x24] sm:$0xf]
        %v950 = vld [vmem:[%s939 + $0x28] sm:$0xf]
        %v951 = vld [vmem:[%s939 + $0x2c] sm:$0xf]
        %v952 = vld [vmem:[%s939 + $0x30] sm:$0xf]
        %v953 = vld [vmem:[%s939 + $0x34] sm:$0xf]
        %v954 = vld [vmem:[%s939 + $0x38] sm:$0xf]
        %v955 = vld [vmem:[%s939 + $0x3c] sm:$0xf]
        %v965 = vunpack.c.l.b16 %v930
        %v966 = vunpack.c.l.b16 %v931
        %v967 = vunpack.c.l.b16 %v932
        %v968 = vunpack.c.l.b16 %v933
        %v969 = vunpack.c.l.b16 %v934
        %v970 = vunpack.c.l.b16 %v935
        %v971 = vunpack.c.l.b16 %v936
        %v972 = vunpack.c.l.b16 %v937
        %v973 = vunpack.c.l.b16 %v938
        %v974 = vpack.c.b16 %v966, %v965
        %v975 = vpack.c.b16 %v968, %v967
        %v976 = vpack.c.b16 %v970, %v969
        %v977 = vpack.c.b16 %v972, %v971
        %v978 = vpack.c.b16 %v973, %v973
        %v980 = vshrl.u32 %v974, 16
        %v982 = vshll.u32 %v974, 16
        %v984 = vrot.slane %v982, 1
        %v985 = vor.u32 %v980, %v984
        %v987 = vshll.u32 %v975, 16
        %v989 = vrot.slane %v987, 1
        %v990 = vsel %vm333, %v985, %v989
        %v991 = vshrl.u32 %v975, 16
        %v993 = vor.u32 %v991, %v989
        %v995 = vshll.u32 %v976, 16
        %v997 = vrot.slane %v995, 1
        %v998 = vsel %vm333, %v993, %v997
        %v999 = vshrl.u32 %v976, 16
        %v1001 = vor.u32 %v999, %v997
        %v1003 = vshll.u32 %v977, 16
        %v1005 = vrot.slane %v1003, 1
        %v1006 = vsel %vm333, %v1001, %v1005
        %v1007 = vshrl.u32 %v977, 16
        %v1009 = vor.u32 %v1007, %v1005
        %v1011 = vshll.u32 %v978, 16
        %v1013 = vrot.slane %v1011, 1
        %v1014 = vsel %vm333, %v1009, %v1013
        %v1035 = vunpack.c.l.b16 %v940
        %v1036 = vunpack.c.l.b16 %v941
        %v1037 = vunpack.c.l.b16 %v942
        %v1038 = vunpack.c.l.b16 %v943
        %v1039 = vunpack.c.l.b16 %v944
        %v1040 = vunpack.c.l.b16 %v945
        %v1041 = vunpack.c.l.b16 %v946
        %v1042 = vunpack.c.l.b16 %v947
        %v1043 = vunpack.c.l.b16 %v948
        %v1044 = vunpack.c.l.b16 %v949
        %v1045 = vunpack.c.l.b16 %v950
        %v1046 = vunpack.c.l.b16 %v951
        %v1047 = vunpack.c.l.b16 %v952
        %v1048 = vunpack.c.l.b16 %v953
        %v1049 = vunpack.c.l.b16 %v954
        %v1050 = vunpack.c.l.b16 %v955
        %v1051 = vpack.c.b16 %v1036, %v1035
        %v1052 = vpack.c.b16 %v1038, %v1037
        %v1053 = vpack.c.b16 %v1040, %v1039
        %v1054 = vpack.c.b16 %v1042, %v1041
        %v1055 = vpack.c.b16 %v1044, %v1043
        %v1056 = vpack.c.b16 %v1046, %v1045
        %v1057 = vpack.c.b16 %v1048, %v1047
        %v1058 = vpack.c.b16 %v1050, %v1049
        %1067 = vmatprep.subr.bf16.mxu0 0
        %1068 = vmatpush1.bf16.msra.mxu0 %v1051
        %1069 = vmatprep.subr.bf16.mxu0 0
        %1070 = vmatpush1.bf16.msra.mxu0 %v1052
        %1071 = vmatprep.subr.bf16.mxu0 0
        %1072 = vmatpush1.bf16.msra.mxu0 %v1053
        %1073 = vmatprep.subr.bf16.mxu0 0
        %1074 = vmatpush1.bf16.msra.mxu0 %v1054
        %1075 = vmatprep.subr.bf16.mxu0 0
        %1076 = vmatpush1.bf16.msra.mxu0 %v1055
        %1077 = vmatprep.subr.bf16.mxu0 0
        %1078 = vmatpush1.bf16.msra.mxu0 %v1056
        %1079 = vmatprep.subr.bf16.mxu0 0
        %1080 = vmatpush1.bf16.msra.mxu0 %v1057
        %1081 = vmatprep.subr.bf16.mxu0 0
        %1082 = vmatpush1.bf16.msra.mxu0 %v1058
        %1083 = vmatprep.subr.bf16.mxu0 0
        %1084 = vmatpush1.bf16.msra.mxu0 0
        %1085 = vmatprep.subr.bf16.mxu0 0
        %1086 = vmatpush1.bf16.msra.mxu0 0
        %1087 = vmatprep.subr.bf16.mxu0 0
        %1088 = vmatpush1.bf16.msra.mxu0 0
        %1089 = vmatprep.subr.bf16.mxu0 0
        %1090 = vmatpush1.bf16.msra.mxu0 0
        %1091 = vmatprep.subr.bf16.mxu0 0
        %1092 = vmatpush1.bf16.msra.mxu0 0
        %1093 = vmatprep.subr.bf16.mxu0 0
        %1094 = vmatpush1.bf16.msra.mxu0 0
        %1095 = vmatprep.subr.bf16.mxu0 0
        %1096 = vmatpush1.bf16.msra.mxu0 0
        %1097 = vmatprep.subr.bf16.mxu0 0
        %1098 = vmatpush1.bf16.msra.mxu0 0
        %1099 = vmatprep.mubr.bf16.mxu0 0
        %1100 = vmatmul.mubr.bf16.gmra.mrb[0].mxu0 %v990
        %v1101 = vpop.f32.mrb[0].mxu0
        %v1102 = vadd.f32 0.0, %v1101
        %v1103 = vpop.f32.mrb[0].mxu0
        %v1104 = vpop.f32.mrb[0].mxu0
        %v1105 = vadd.f32 0.0, %v1104
        %v1106 = vpop.f32.mrb[0].mxu0
        %1107 = vmatprep.mubr.bf16.mxu0 0
        %1108 = vmatmul.mubr.bf16.gmra.mrb[0].mxu0 %v998
        %v1109 = vpop.f32.mrb[0].mxu0
        %v1110 = vadd.f32 0.0, %v1109
        %v1111 = vpop.f32.mrb[0].mxu0
        %v1112 = vpop.f32.mrb[0].mxu0
        %v1113 = vadd.f32 0.0, %v1112
        %v1114 = vpop.f32.mrb[0].mxu0
        %1115 = vmatprep.mubr.bf16.mxu0 0
        %1116 = vmatmul.mubr.bf16.gmra.mrb[0].mxu0 %v1006
        %v1117 = vpop.f32.mrb[0].mxu0
        %v1118 = vadd.f32 0.0, %v1117
        %v1119 = vpop.f32.mrb[0].mxu0
        %v1120 = vpop.f32.mrb[0].mxu0
        %v1121 = vadd.f32 0.0, %v1120
        %v1122 = vpop.f32.mrb[0].mxu0
        %1123 = vmatprep.mubr.bf16.mxu0 0
        %1124 = vmatmul.mubr.bf16.gmra.mrb[0].mxu0 %v1014
        %v1125 = vpop.f32.mrb[0].mxu0
        %v1126 = vadd.f32 0.0, %v1125
        %v1127 = vpop.f32.mrb[0].mxu0
        %v1128 = vpop.f32.mrb[0].mxu0
        %v1129 = vadd.f32 0.0, %v1128
        %v1130 = vpop.f32.mrb[0].mxu0
        %1131 = vdwg.mxu0
        %v1132 = vadd.f32 %v922, %v1102
        %v1133 = vadd.f32 %v923, %v1105
        %v1134 = vadd.f32 %v924, %v1110
        %v1135 = vadd.f32 %v925, %v1113
        %v1136 = vadd.f32 %v926, %v1118
        %v1137 = vadd.f32 %v927, %v1121
        %v1138 = vadd.f32 %v928, %v1126
        %v1139 = vadd.f32 %v929, %v1129
        %v1140 = vld [vmem:[%s233 + $0x8] sm:$0xe]
        %s1141 = scalar_lea.vmem [#allocation5], 320
        %v1142 = vld [vmem:[%s1141] sm:$0xf]
        %v1143 = vld [vmem:[%s1141 + $0x4] sm:$0xf]
        %v1144 = vld [vmem:[%s1141 + $0x8] sm:$0xf]
        %v1145 = vld [vmem:[%s1141 + $0xc] sm:$0xf]
        %v1146 = vld [vmem:[%s1141 + $0x10] sm:$0xf]
        %v1147 = vld [vmem:[%s1141 + $0x14] sm:$0xf]
        %v1148 = vld [vmem:[%s1141 + $0x18] sm:$0xf]
        %v1149 = vld [vmem:[%s1141 + $0x1c] sm:$0xf]
        %v1150 = vld [vmem:[%s1141 + $0x20] sm:$0xf]
        %v1151 = vld [vmem:[%s1141 + $0x24] sm:$0xf]
        %v1152 = vld [vmem:[%s1141 + $0x28] sm:$0xf]
        %v1153 = vld [vmem:[%s1141 + $0x2c] sm:$0xf]
        %v1154 = vld [vmem:[%s1141 + $0x30] sm:$0xf]
        %v1155 = vld [vmem:[%s1141 + $0x34] sm:$0xf]
        %v1156 = vld [vmem:[%s1141 + $0x38] sm:$0xf]
        %v1157 = vld [vmem:[%s1141 + $0x3c] sm:$0xf]
        %v1159 = vunpack.c.l.b16 %v1140
        %v1160 = vpack.c.b16 %v966, %v1159
        %v1161 = vrot.slane %v1160, 1
        %v1162 = vrot.slane %v975, 1
        %v1163 = vsel %vm625, %v1161, %v1162
        %v1164 = vrot.slane %v976, 1
        %v1165 = vsel %vm625, %v1162, %v1164
        %v1166 = vrot.slane %v977, 1
        %v1167 = vsel %vm625, %v1164, %v1166
        %v1168 = vrot.slane %v978, 1
        %v1169 = vsel %vm625, %v1166, %v1168
        %v1190 = vunpack.c.l.b16 %v1142
        %v1191 = vunpack.c.l.b16 %v1143
        %v1192 = vunpack.c.l.b16 %v1144
        %v1193 = vunpack.c.l.b16 %v1145
        %v1194 = vunpack.c.l.b16 %v1146
        %v1195 = vunpack.c.l.b16 %v1147
        %v1196 = vunpack.c.l.b16 %v1148
        %v1197 = vunpack.c.l.b16 %v1149
        %v1198 = vunpack.c.l.b16 %v1150
        %v1199 = vunpack.c.l.b16 %v1151
        %v1200 = vunpack.c.l.b16 %v1152
        %v1201 = vunpack.c.l.b16 %v1153
        %v1202 = vunpack.c.l.b16 %v1154
        %v1203 = vunpack.c.l.b16 %v1155
        %v1204 = vunpack.c.l.b16 %v1156
        %v1205 = vunpack.c.l.b16 %v1157
        %v1206 = vpack.c.b16 %v1191, %v1190
        %v1207 = vpack.c.b16 %v1193, %v1192
        %v1208 = vpack.c.b16 %v1195, %v1194
        %v1209 = vpack.c.b16 %v1197, %v1196
        %v1210 = vpack.c.b16 %v1199, %v1198
        %v1211 = vpack.c.b16 %v1201, %v1200
        %v1212 = vpack.c.b16 %v1203, %v1202
        %v1213 = vpack.c.b16 %v1205, %v1204
        %1222 = vmatprep.subr.bf16.mxu0 0
        %1223 = vmatpush1.bf16.msra.mxu0 %v1206
        %1224 = vmatprep.subr.bf16.mxu0 0
        %1225 = vmatpush1.bf16.msra.mxu0 %v1207
        %1226 = vmatprep.subr.bf16.mxu0 0
        %1227 = vmatpush1.bf16.msra.mxu0 %v1208
        %1228 = vmatprep.subr.bf16.mxu0 0
        %1229 = vmatpush1.bf16.msra.mxu0 %v1209
        %1230 = vmatprep.subr.bf16.mxu0 0
        %1231 = vmatpush1.bf16.msra.mxu0 %v1210
        %1232 = vmatprep.subr.bf16.mxu0 0
        %1233 = vmatpush1.bf16.msra.mxu0 %v1211
        %1234 = vmatprep.subr.bf16.mxu0 0
        %1235 = vmatpush1.bf16.msra.mxu0 %v1212
        %1236 = vmatprep.subr.bf16.mxu0 0
        %1237 = vmatpush1.bf16.msra.mxu0 %v1213
        %1238 = vmatprep.subr.bf16.mxu0 0
        %1239 = vmatpush1.bf16.msra.mxu0 0
        %1240 = vmatprep.subr.bf16.mxu0 0
        %1241 = vmatpush1.bf16.msra.mxu0 0
        %1242 = vmatprep.subr.bf16.mxu0 0
        %1243 = vmatpush1.bf16.msra.mxu0 0
        %1244 = vmatprep.subr.bf16.mxu0 0
        %1245 = vmatpush1.bf16.msra.mxu0 0
        %1246 = vmatprep.subr.bf16.mxu0 0
        %1247 = vmatpush1.bf16.msra.mxu0 0
        %1248 = vmatprep.subr.bf16.mxu0 0
        %1249 = vmatpush1.bf16.msra.mxu0 0
        %1250 = vmatprep.subr.bf16.mxu0 0
        %1251 = vmatpush1.bf16.msra.mxu0 0
        %1252 = vmatprep.subr.bf16.mxu0 0
        %1253 = vmatpush1.bf16.msra.mxu0 0
        %1254 = vmatprep.mubr.bf16.mxu0 0
        %1255 = vmatmul.mubr.bf16.gmra.mrb[0].mxu0 %v1163
        %v1256 = vpop.f32.mrb[0].mxu0
        %v1257 = vadd.f32 0.0, %v1256
        %v1258 = vpop.f32.mrb[0].mxu0
        %v1259 = vpop.f32.mrb[0].mxu0
        %v1260 = vadd.f32 0.0, %v1259
        %v1261 = vpop.f32.mrb[0].mxu0
        %1262 = vmatprep.mubr.bf16.mxu0 0
        %1263 = vmatmul.mubr.bf16.gmra.mrb[0].mxu0 %v1165
        %v1264 = vpop.f32.mrb[0].mxu0
        %v1265 = vadd.f32 0.0, %v1264
        %v1266 = vpop.f32.mrb[0].mxu0
        %v1267 = vpop.f32.mrb[0].mxu0
        %v1268 = vadd.f32 0.0, %v1267
        %v1269 = vpop.f32.mrb[0].mxu0
        %1270 = vmatprep.mubr.bf16.mxu0 0
        %1271 = vmatmul.mubr.bf16.gmra.mrb[0].mxu0 %v1167
        %v1272 = vpop.f32.mrb[0].mxu0
        %v1273 = vadd.f32 0.0, %v1272
        %v1274 = vpop.f32.mrb[0].mxu0
        %v1275 = vpop.f32.mrb[0].mxu0
        %v1276 = vadd.f32 0.0, %v1275
        %v1277 = vpop.f32.mrb[0].mxu0
        %1278 = vmatprep.mubr.bf16.mxu0 0
        %1279 = vmatmul.mubr.bf16.gmra.mrb[0].mxu0 %v1169
        %v1280 = vpop.f32.mrb[0].mxu0
        %v1281 = vadd.f32 0.0, %v1280
        %v1282 = vpop.f32.mrb[0].mxu0
        %v1283 = vpop.f32.mrb[0].mxu0
        %v1284 = vadd.f32 0.0, %v1283
        %v1285 = vpop.f32.mrb[0].mxu0
        %1286 = vdwg.mxu0
        %v1287 = vadd.f32 %v1132, %v1257
        %v1288 = vadd.f32 %v1133, %v1260
        %v1289 = vadd.f32 %v1134, %v1265
        %v1290 = vadd.f32 %v1135, %v1268
        %v1291 = vadd.f32 %v1136, %v1273
        %v1292 = vadd.f32 %v1137, %v1276
        %v1293 = vadd.f32 %v1138, %v1281
        %v1294 = vadd.f32 %v1139, %v1284
        %v1295 = vld [vmem:[%s233 + $0x10] sm:$0xf]
        %v1296 = vld [vmem:[%s233 + $0x14] sm:$0xf]
        %v1297 = vld [vmem:[%s233 + $0x18] sm:$0xf]
        %v1298 = vld [vmem:[%s233 + $0x1c] sm:$0xf]
        %v1299 = vld [vmem:[%s233 + $0x20] sm:$0xf]
        %v1300 = vld [vmem:[%s233 + $0x24] sm:$0xf]
        %v1301 = vld [vmem:[%s233 + $0x28] sm:$0xf]
        %v1302 = vld [vmem:[%s233 + $0x2c] sm:$0xf]
        %s1303 = scalar_lea.vmem [#allocation5], 384
        %v1304 = vld [vmem:[%s1303] sm:$0xf]
        %v1305 = vld [vmem:[%s1303 + $0x4] sm:$0xf]
        %v1306 = vld [vmem:[%s1303 + $0x8] sm:$0xf]
        %v1307 = vld [vmem:[%s1303 + $0xc] sm:$0xf]
        %v1308 = vld [vmem:[%s1303 + $0x10] sm:$0xf]
        %v1309 = vld [vmem:[%s1303 + $0x14] sm:$0xf]
        %v1310 = vld [vmem:[%s1303 + $0x18] sm:$0xf]
        %v1311 = vld [vmem:[%s1303 + $0x1c] sm:$0xf]
        %v1312 = vld [vmem:[%s1303 + $0x20] sm:$0xf]
        %v1313 = vld [vmem:[%s1303 + $0x24] sm:$0xf]
        %v1314 = vld [vmem:[%s1303 + $0x28] sm:$0xf]
        %v1315 = vld [vmem:[%s1303 + $0x2c] sm:$0xf]
        %v1316 = vld [vmem:[%s1303 + $0x30] sm:$0xf]
        %v1317 = vld [vmem:[%s1303 + $0x34] sm:$0xf]
        %v1318 = vld [vmem:[%s1303 + $0x38] sm:$0xf]
        %v1319 = vld [vmem:[%s1303 + $0x3c] sm:$0xf]
        %v1328 = vunpack.c.l.b16 %v1295
        %v1329 = vunpack.c.l.b16 %v1296
        %v1330 = vunpack.c.l.b16 %v1297
        %v1331 = vunpack.c.l.b16 %v1298
        %v1332 = vunpack.c.l.b16 %v1299
        %v1333 = vunpack.c.l.b16 %v1300
        %v1334 = vunpack.c.l.b16 %v1301
        %v1335 = vunpack.c.l.b16 %v1302
        %v1336 = vpack.c.b16 %v1329, %v1328
        %v1337 = vpack.c.b16 %v1331, %v1330
        %v1338 = vpack.c.b16 %v1333, %v1332
        %v1339 = vpack.c.b16 %v1335, %v1334
        %v1360 = vunpack.c.l.b16 %v1304
        %v1361 = vunpack.c.l.b16 %v1305
        %v1362 = vunpack.c.l.b16 %v1306
        %v1363 = vunpack.c.l.b16 %v1307
        %v1364 = vunpack.c.l.b16 %v1308
        %v1365 = vunpack.c.l.b16 %v1309
        %v1366 = vunpack.c.l.b16 %v1310
        %v1367 = vunpack.c.l.b16 %v1311
        %v1368 = vunpack.c.l.b16 %v1312
        %v1369 = vunpack.c.l.b16 %v1313
        %v1370 = vunpack.c.l.b16 %v1314
        %v1371 = vunpack.c.l.b16 %v1315
        %v1372 = vunpack.c.l.b16 %v1316
        %v1373 = vunpack.c.l.b16 %v1317
        %v1374 = vunpack.c.l.b16 %v1318
        %v1375 = vunpack.c.l.b16 %v1319
        %v1376 = vpack.c.b16 %v1361, %v1360
        %v1377 = vpack.c.b16 %v1363, %v1362
        %v1378 = vpack.c.b16 %v1365, %v1364
        %v1379 = vpack.c.b16 %v1367, %v1366
        %v1380 = vpack.c.b16 %v1369, %v1368
        %v1381 = vpack.c.b16 %v1371, %v1370
        %v1382 = vpack.c.b16 %v1373, %v1372
        %v1383 = vpack.c.b16 %v1375, %v1374
        %1392 = vmatprep.subr.bf16.mxu0 0
        %1393 = vmatpush1.bf16.msra.mxu0 %v1376
        %1394 = vmatprep.subr.bf16.mxu0 0
        %1395 = vmatpush1.bf16.msra.mxu0 %v1377
        %1396 = vmatprep.subr.bf16.mxu0 0
        %1397 = vmatpush1.bf16.msra.mxu0 %v1378
        %1398 = vmatprep.subr.bf16.mxu0 0
        %1399 = vmatpush1.bf16.msra.mxu0 %v1379
        %1400 = vmatprep.subr.bf16.mxu0 0
        %1401 = vmatpush1.bf16.msra.mxu0 %v1380
        %1402 = vmatprep.subr.bf16.mxu0 0
        %1403 = vmatpush1.bf16.msra.mxu0 %v1381
        %1404 = vmatprep.subr.bf16.mxu0 0
        %1405 = vmatpush1.bf16.msra.mxu0 %v1382
        %1406 = vmatprep.subr.bf16.mxu0 0
        %1407 = vmatpush1.bf16.msra.mxu0 %v1383
        %1408 = vmatprep.subr.bf16.mxu0 0
        %1409 = vmatpush1.bf16.msra.mxu0 0
        %1410 = vmatprep.subr.bf16.mxu0 0
        %1411 = vmatpush1.bf16.msra.mxu0 0
        %1412 = vmatprep.subr.bf16.mxu0 0
        %1413 = vmatpush1.bf16.msra.mxu0 0
        %1414 = vmatprep.subr.bf16.mxu0 0
        %1415 = vmatpush1.bf16.msra.mxu0 0
        %1416 = vmatprep.subr.bf16.mxu0 0
        %1417 = vmatpush1.bf16.msra.mxu0 0
        %1418 = vmatprep.subr.bf16.mxu0 0
        %1419 = vmatpush1.bf16.msra.mxu0 0
        %1420 = vmatprep.subr.bf16.mxu0 0
        %1421 = vmatpush1.bf16.msra.mxu0 0
        %1422 = vmatprep.subr.bf16.mxu0 0
        %1423 = vmatpush1.bf16.msra.mxu0 0
        %1424 = vmatprep.mubr.bf16.mxu0 0
        %1425 = vmatmul.mubr.bf16.gmra.mrb[0].mxu0 %v1336
        %v1426 = vpop.f32.mrb[0].mxu0
        %v1427 = vadd.f32 0.0, %v1426
        %v1428 = vpop.f32.mrb[0].mxu0
        %v1429 = vpop.f32.mrb[0].mxu0
        %v1430 = vadd.f32 0.0, %v1429
        %v1431 = vpop.f32.mrb[0].mxu0
        %1432 = vmatprep.mubr.bf16.mxu0 0
        %1433 = vmatmul.mubr.bf16.gmra.mrb[0].mxu0 %v1337
        %v1434 = vpop.f32.mrb[0].mxu0
        %v1435 = vadd.f32 0.0, %v1434
        %v1436 = vpop.f32.mrb[0].mxu0
        %v1437 = vpop.f32.mrb[0].mxu0
        %v1438 = vadd.f32 0.0, %v1437
        %v1439 = vpop.f32.mrb[0].mxu0
        %1440 = vmatprep.mubr.bf16.mxu0 0
        %1441 = vmatmul.mubr.bf16.gmra.mrb[0].mxu0 %v1338
        %v1442 = vpop.f32.mrb[0].mxu0
        %v1443 = vadd.f32 0.0, %v1442
        %v1444 = vpop.f32.mrb[0].mxu0
        %v1445 = vpop.f32.mrb[0].mxu0
        %v1446 = vadd.f32 0.0, %v1445
        %v1447 = vpop.f32.mrb[0].mxu0
        %1448 = vmatprep.mubr.bf16.mxu0 0
        %1449 = vmatmul.mubr.bf16.gmra.mrb[0].mxu0 %v1339
        %v1450 = vpop.f32.mrb[0].mxu0
        %v1451 = vadd.f32 0.0, %v1450
        %v1452 = vpop.f32.mrb[0].mxu0
        %v1453 = vpop.f32.mrb[0].mxu0
        %v1454 = vadd.f32 0.0, %v1453
        %v1455 = vpop.f32.mrb[0].mxu0
        %1456 = vdwg.mxu0
        %v1457 = vadd.f32 %v1287, %v1427
        %v1458 = vadd.f32 %v1288, %v1430
        %v1459 = vadd.f32 %v1289, %v1435
        %v1460 = vadd.f32 %v1290, %v1438
        %v1461 = vadd.f32 %v1291, %v1443
        %v1462 = vadd.f32 %v1292, %v1446
        %v1463 = vadd.f32 %v1293, %v1451
        %v1464 = vadd.f32 %v1294, %v1454
        %v1465 = vld [vmem:[%s233 + $0x10] sm:$0xf]
        %v1466 = vld [vmem:[%s233 + $0x14] sm:$0xf]
        %v1467 = vld [vmem:[%s233 + $0x18] sm:$0xf]
        %v1468 = vld [vmem:[%s233 + $0x1c] sm:$0xf]
        %v1469 = vld [vmem:[%s233 + $0x20] sm:$0xf]
        %v1470 = vld [vmem:[%s233 + $0x24] sm:$0xf]
        %v1471 = vld [vmem:[%s233 + $0x28] sm:$0xf]
        %v1472 = vld [vmem:[%s233 + $0x2c] sm:$0xf]
        %v1473 = vld [vmem:[%s233 + $0x30] sm:$0x1]
        %s1474 = scalar_lea.vmem [#allocation5], 448
        %v1475 = vld [vmem:[%s1474] sm:$0xf]
        %v1476 = vld [vmem:[%s1474 + $0x4] sm:$0xf]
        %v1477 = vld [vmem:[%s1474 + $0x8] sm:$0xf]
        %v1478 = vld [vmem:[%s1474 + $0xc] sm:$0xf]
        %v1479 = vld [vmem:[%s1474 + $0x10] sm:$0xf]
        %v1480 = vld [vmem:[%s1474 + $0x14] sm:$0xf]
        %v1481 = vld [vmem:[%s1474 + $0x18] sm:$0xf]
        %v1482 = vld [vmem:[%s1474 + $0x1c] sm:$0xf]
        %v1483 = vld [vmem:[%s1474 + $0x20] sm:$0xf]
        %v1484 = vld [vmem:[%s1474 + $0x24] sm:$0xf]
        %v1485 = vld [vmem:[%s1474 + $0x28] sm:$0xf]
        %v1486 = vld [vmem:[%s1474 + $0x2c] sm:$0xf]
        %v1487 = vld [vmem:[%s1474 + $0x30] sm:$0xf]
        %v1488 = vld [vmem:[%s1474 + $0x34] sm:$0xf]
        %v1489 = vld [vmem:[%s1474 + $0x38] sm:$0xf]
        %v1490 = vld [vmem:[%s1474 + $0x3c] sm:$0xf]
        %v1500 = vunpack.c.l.b16 %v1465
        %v1501 = vunpack.c.l.b16 %v1466
        %v1502 = vunpack.c.l.b16 %v1467
        %v1503 = vunpack.c.l.b16 %v1468
        %v1504 = vunpack.c.l.b16 %v1469
        %v1505 = vunpack.c.l.b16 %v1470
        %v1506 = vunpack.c.l.b16 %v1471
        %v1507 = vunpack.c.l.b16 %v1472
        %v1508 = vunpack.c.l.b16 %v1473
        %v1509 = vpack.c.b16 %v1501, %v1500
        %v1510 = vpack.c.b16 %v1503, %v1502
        %v1511 = vpack.c.b16 %v1505, %v1504
        %v1512 = vpack.c.b16 %v1507, %v1506
        %v1513 = vpack.c.b16 %v1508, %v1508
        %v1515 = vshrl.u32 %v1509, 16
        %v1517 = vshll.u32 %v1509, 16
        %v1519 = vrot.slane %v1517, 1
        %v1520 = vor.u32 %v1515, %v1519
        %v1522 = vshll.u32 %v1510, 16
        %v1524 = vrot.slane %v1522, 1
        %v1525 = vsel %vm333, %v1520, %v1524
        %v1526 = vshrl.u32 %v1510, 16
        %v1528 = vor.u32 %v1526, %v1524
        %v1530 = vshll.u32 %v1511, 16
        %v1532 = vrot.slane %v1530, 1
        %v1533 = vsel %vm333, %v1528, %v1532
        %v1534 = vshrl.u32 %v1511, 16
        %v1536 = vor.u32 %v1534, %v1532
        %v1538 = vshll.u32 %v1512, 16
        %v1540 = vrot.slane %v1538, 1
        %v1541 = vsel %vm333, %v1536, %v1540
        %v1542 = vshrl.u32 %v1512, 16
        %v1544 = vor.u32 %v1542, %v1540
        %v1546 = vshll.u32 %v1513, 16
        %v1548 = vrot.slane %v1546, 1
        %v1549 = vsel %vm333, %v1544, %v1548
        %v1570 = vunpack.c.l.b16 %v1475
        %v1571 = vunpack.c.l.b16 %v1476
        %v1572 = vunpack.c.l.b16 %v1477
        %v1573 = vunpack.c.l.b16 %v1478
        %v1574 = vunpack.c.l.b16 %v1479
        %v1575 = vunpack.c.l.b16 %v1480
        %v1576 = vunpack.c.l.b16 %v1481
        %v1577 = vunpack.c.l.b16 %v1482
        %v1578 = vunpack.c.l.b16 %v1483
        %v1579 = vunpack.c.l.b16 %v1484
        %v1580 = vunpack.c.l.b16 %v1485
        %v1581 = vunpack.c.l.b16 %v1486
        %v1582 = vunpack.c.l.b16 %v1487
        %v1583 = vunpack.c.l.b16 %v1488
        %v1584 = vunpack.c.l.b16 %v1489
        %v1585 = vunpack.c.l.b16 %v1490
        %v1586 = vpack.c.b16 %v1571, %v1570
        %v1587 = vpack.c.b16 %v1573, %v1572
        %v1588 = vpack.c.b16 %v1575, %v1574
        %v1589 = vpack.c.b16 %v1577, %v1576
        %v1590 = vpack.c.b16 %v1579, %v1578
        %v1591 = vpack.c.b16 %v1581, %v1580
        %v1592 = vpack.c.b16 %v1583, %v1582
        %v1593 = vpack.c.b16 %v1585, %v1584
        %1602 = vmatprep.subr.bf16.mxu0 0
        %1603 = vmatpush1.bf16.msra.mxu0 %v1586
        %1604 = vmatprep.subr.bf16.mxu0 0
        %1605 = vmatpush1.bf16.msra.mxu0 %v1587
        %1606 = vmatprep.subr.bf16.mxu0 0
        %1607 = vmatpush1.bf16.msra.mxu0 %v1588
        %1608 = vmatprep.subr.bf16.mxu0 0
        %1609 = vmatpush1.bf16.msra.mxu0 %v1589
        %1610 = vmatprep.subr.bf16.mxu0 0
        %1611 = vmatpush1.bf16.msra.mxu0 %v1590
        %1612 = vmatprep.subr.bf16.mxu0 0
        %1613 = vmatpush1.bf16.msra.mxu0 %v1591
        %1614 = vmatprep.subr.bf16.mxu0 0
        %1615 = vmatpush1.bf16.msra.mxu0 %v1592
        %1616 = vmatprep.subr.bf16.mxu0 0
        %1617 = vmatpush1.bf16.msra.mxu0 %v1593
        %1618 = vmatprep.subr.bf16.mxu0 0
        %1619 = vmatpush1.bf16.msra.mxu0 0
        %1620 = vmatprep.subr.bf16.mxu0 0
        %1621 = vmatpush1.bf16.msra.mxu0 0
        %1622 = vmatprep.subr.bf16.mxu0 0
        %1623 = vmatpush1.bf16.msra.mxu0 0
        %1624 = vmatprep.subr.bf16.mxu0 0
        %1625 = vmatpush1.bf16.msra.mxu0 0
        %1626 = vmatprep.subr.bf16.mxu0 0
        %1627 = vmatpush1.bf16.msra.mxu0 0
        %1628 = vmatprep.subr.bf16.mxu0 0
        %1629 = vmatpush1.bf16.msra.mxu0 0
        %1630 = vmatprep.subr.bf16.mxu0 0
        %1631 = vmatpush1.bf16.msra.mxu0 0
        %1632 = vmatprep.subr.bf16.mxu0 0
        %1633 = vmatpush1.bf16.msra.mxu0 0
        %1634 = vmatprep.mubr.bf16.mxu0 0
        %1635 = vmatmul.mubr.bf16.gmra.mrb[0].mxu0 %v1525
        %v1636 = vpop.f32.mrb[0].mxu0
        %v1637 = vadd.f32 0.0, %v1636
        %v1638 = vpop.f32.mrb[0].mxu0
        %v1639 = vpop.f32.mrb[0].mxu0
        %v1640 = vadd.f32 0.0, %v1639
        %v1641 = vpop.f32.mrb[0].mxu0
        %1642 = vmatprep.mubr.bf16.mxu0 0
        %1643 = vmatmul.mubr.bf16.gmra.mrb[0].mxu0 %v1533
        %v1644 = vpop.f32.mrb[0].mxu0
        %v1645 = vadd.f32 0.0, %v1644
        %v1646 = vpop.f32.mrb[0].mxu0
        %v1647 = vpop.f32.mrb[0].mxu0
        %v1648 = vadd.f32 0.0, %v1647
        %v1649 = vpop.f32.mrb[0].mxu0
        %1650 = vmatprep.mubr.bf16.mxu0 0
        %1651 = vmatmul.mubr.bf16.gmra.mrb[0].mxu0 %v1541
        %v1652 = vpop.f32.mrb[0].mxu0
        %v1653 = vadd.f32 0.0, %v1652
        %v1654 = vpop.f32.mrb[0].mxu0
        %v1655 = vpop.f32.mrb[0].mxu0
        %v1656 = vadd.f32 0.0, %v1655
        %v1657 = vpop.f32.mrb[0].mxu0
        %1658 = vmatprep.mubr.bf16.mxu0 0
        %1659 = vmatmul.mubr.bf16.gmra.mrb[0].mxu0 %v1549
        %v1660 = vpop.f32.mrb[0].mxu0
        %v1661 = vadd.f32 0.0, %v1660
        %v1662 = vpop.f32.mrb[0].mxu0
        %v1663 = vpop.f32.mrb[0].mxu0
        %v1664 = vadd.f32 0.0, %v1663
        %v1665 = vpop.f32.mrb[0].mxu0
        %1666 = vdwg.mxu0
        %v1667 = vadd.f32 %v1457, %v1637
        %v1668 = vadd.f32 %v1458, %v1640
        %v1669 = vadd.f32 %v1459, %v1645
        %v1670 = vadd.f32 %v1460, %v1648
        %v1671 = vadd.f32 %v1461, %v1653
        %v1672 = vadd.f32 %v1462, %v1656
        %v1673 = vadd.f32 %v1463, %v1661
        %v1674 = vadd.f32 %v1464, %v1664
        %v1675 = vld [vmem:[%s233 + $0x10] sm:$0xe]
        %s1676 = scalar_lea.vmem [#allocation5], 512
        %v1677 = vld [vmem:[%s1676] sm:$0xf]
        %v1678 = vld [vmem:[%s1676 + $0x4] sm:$0xf]
        %v1679 = vld [vmem:[%s1676 + $0x8] sm:$0xf]
        %v1680 = vld [vmem:[%s1676 + $0xc] sm:$0xf]
        %v1681 = vld [vmem:[%s1676 + $0x10] sm:$0xf]
        %v1682 = vld [vmem:[%s1676 + $0x14] sm:$0xf]
        %v1683 = vld [vmem:[%s1676 + $0x18] sm:$0xf]
        %v1684 = vld [vmem:[%s1676 + $0x1c] sm:$0xf]
        %v1685 = vld [vmem:[%s1676 + $0x20] sm:$0xf]
        %v1686 = vld [vmem:[%s1676 + $0x24] sm:$0xf]
        %v1687 = vld [vmem:[%s1676 + $0x28] sm:$0xf]
        %v1688 = vld [vmem:[%s1676 + $0x2c] sm:$0xf]
        %v1689 = vld [vmem:[%s1676 + $0x30] sm:$0xf]
        %v1690 = vld [vmem:[%s1676 + $0x34] sm:$0xf]
        %v1691 = vld [vmem:[%s1676 + $0x38] sm:$0xf]
        %v1692 = vld [vmem:[%s1676 + $0x3c] sm:$0xf]
        %v1694 = vunpack.c.l.b16 %v1675
        %v1695 = vpack.c.b16 %v1501, %v1694
        %v1696 = vrot.slane %v1695, 1
        %v1697 = vrot.slane %v1510, 1
        %v1698 = vsel %vm625, %v1696, %v1697
        %v1699 = vrot.slane %v1511, 1
        %v1700 = vsel %vm625, %v1697, %v1699
        %v1701 = vrot.slane %v1512, 1
        %v1702 = vsel %vm625, %v1699, %v1701
        %v1703 = vrot.slane %v1513, 1
        %v1704 = vsel %vm625, %v1701, %v1703
        %v1725 = vunpack.c.l.b16 %v1677
        %v1726 = vunpack.c.l.b16 %v1678
        %v1727 = vunpack.c.l.b16 %v1679
        %v1728 = vunpack.c.l.b16 %v1680
        %v1729 = vunpack.c.l.b16 %v1681
        %v1730 = vunpack.c.l.b16 %v1682
        %v1731 = vunpack.c.l.b16 %v1683
        %v1732 = vunpack.c.l.b16 %v1684
        %v1733 = vunpack.c.l.b16 %v1685
        %v1734 = vunpack.c.l.b16 %v1686
        %v1735 = vunpack.c.l.b16 %v1687
        %v1736 = vunpack.c.l.b16 %v1688
        %v1737 = vunpack.c.l.b16 %v1689
        %v1738 = vunpack.c.l.b16 %v1690
        %v1739 = vunpack.c.l.b16 %v1691
        %v1740 = vunpack.c.l.b16 %v1692
        %v1741 = vpack.c.b16 %v1726, %v1725
        %v1742 = vpack.c.b16 %v1728, %v1727
        %v1743 = vpack.c.b16 %v1730, %v1729
        %v1744 = vpack.c.b16 %v1732, %v1731
        %v1745 = vpack.c.b16 %v1734, %v1733
        %v1746 = vpack.c.b16 %v1736, %v1735
        %v1747 = vpack.c.b16 %v1738, %v1737
        %v1748 = vpack.c.b16 %v1740, %v1739
        %1757 = vmatprep.subr.bf16.mxu0 0
        %1758 = vmatpush1.bf16.msra.mxu0 %v1741
        %1759 = vmatprep.subr.bf16.mxu0 0
        %1760 = vmatpush1.bf16.msra.mxu0 %v1742
        %1761 = vmatprep.subr.bf16.mxu0 0
        %1762 = vmatpush1.bf16.msra.mxu0 %v1743
        %1763 = vmatprep.subr.bf16.mxu0 0
        %1764 = vmatpush1.bf16.msra.mxu0 %v1744
        %1765 = vmatprep.subr.bf16.mxu0 0
        %1766 = vmatpush1.bf16.msra.mxu0 %v1745
        %1767 = vmatprep.subr.bf16.mxu0 0
        %1768 = vmatpush1.bf16.msra.mxu0 %v1746
        %1769 = vmatprep.subr.bf16.mxu0 0
        %1770 = vmatpush1.bf16.msra.mxu0 %v1747
        %1771 = vmatprep.subr.bf16.mxu0 0
        %1772 = vmatpush1.bf16.msra.mxu0 %v1748
        %1773 = vmatprep.subr.bf16.mxu0 0
        %1774 = vmatpush1.bf16.msra.mxu0 0
        %1775 = vmatprep.subr.bf16.mxu0 0
        %1776 = vmatpush1.bf16.msra.mxu0 0
        %1777 = vmatprep.subr.bf16.mxu0 0
        %1778 = vmatpush1.bf16.msra.mxu0 0
        %1779 = vmatprep.subr.bf16.mxu0 0
        %1780 = vmatpush1.bf16.msra.mxu0 0
        %1781 = vmatprep.subr.bf16.mxu0 0
        %1782 = vmatpush1.bf16.msra.mxu0 0
        %1783 = vmatprep.subr.bf16.mxu0 0
        %1784 = vmatpush1.bf16.msra.mxu0 0
        %1785 = vmatprep.subr.bf16.mxu0 0
        %1786 = vmatpush1.bf16.msra.mxu0 0
        %1787 = vmatprep.subr.bf16.mxu0 0
        %1788 = vmatpush1.bf16.msra.mxu0 0
        %1789 = vmatprep.mubr.bf16.mxu0 0
        %1790 = vmatmul.mubr.bf16.gmra.mrb[0].mxu0 %v1698
        %v1791 = vpop.f32.mrb[0].mxu0
        %v1792 = vadd.f32 0.0, %v1791
        %v1793 = vpop.f32.mrb[0].mxu0
        %v1794 = vpop.f32.mrb[0].mxu0
        %v1795 = vadd.f32 0.0, %v1794
        %v1796 = vpop.f32.mrb[0].mxu0
        %1797 = vmatprep.mubr.bf16.mxu0 0
        %1798 = vmatmul.mubr.bf16.gmra.mrb[0].mxu0 %v1700
        %v1799 = vpop.f32.mrb[0].mxu0
        %v1800 = vadd.f32 0.0, %v1799
        %v1801 = vpop.f32.mrb[0].mxu0
        %v1802 = vpop.f32.mrb[0].mxu0
        %v1803 = vadd.f32 0.0, %v1802
        %v1804 = vpop.f32.mrb[0].mxu0
        %1805 = vmatprep.mubr.bf16.mxu0 0
        %1806 = vmatmul.mubr.bf16.gmra.mrb[0].mxu0 %v1702
        %v1807 = vpop.f32.mrb[0].mxu0
        %v1808 = vadd.f32 0.0, %v1807
        %v1809 = vpop.f32.mrb[0].mxu0
        %v1810 = vpop.f32.mrb[0].mxu0
        %v1811 = vadd.f32 0.0, %v1810
        %v1812 = vpop.f32.mrb[0].mxu0
        %1813 = vmatprep.mubr.bf16.mxu0 0
        %1814 = vmatmul.mubr.bf16.gmra.mrb[0].mxu0 %v1704
        %v1815 = vpop.f32.mrb[0].mxu0
        %v1816 = vadd.f32 0.0, %v1815
        %v1817 = vpop.f32.mrb[0].mxu0
        %v1818 = vpop.f32.mrb[0].mxu0
        %v1819 = vadd.f32 0.0, %v1818
        %v1820 = vpop.f32.mrb[0].mxu0
        %1821 = vdwg.mxu0
        %v1822 = vadd.f32 %v1667, %v1792
        %v1823 = vadd.f32 %v1668, %v1795
        %v1824 = vadd.f32 %v1669, %v1800
        %v1825 = vadd.f32 %v1670, %v1803
        %v1826 = vadd.f32 %v1671, %v1808
        %v1827 = vadd.f32 %v1672, %v1811
        %v1828 = vadd.f32 %v1673, %v1816
        %v1829 = vadd.f32 %v1674, %v1819
        %v1830 = vld [vmem:[%s266] sm:$0x1]
        %v1832 = vlaneseq
        %v1833 = vshrl.u32 %v1832, 7
        %v1834 = vsub.s32 0, %v1833
        %v1835 = vrot.slane %v1830, %v1834
        %v1837 = vadd.f32 %v1822, %v1835
        %v1838 = vadd.f32 %v1823, %v1835
        %v1839 = vadd.f32 %v1824, %v1835
        %v1840 = vadd.f32 %v1825, %v1835
        %v1841 = vadd.f32 %v1826, %v1835
        %v1842 = vadd.f32 %v1827, %v1835
        %v1843 = vadd.f32 %v1828, %v1835
        %v1844 = vadd.f32 %v1829, %v1835
        %v1845 = vmax.f32 %v1837, 0.0
        %v1846 = vmax.f32 %v1838, 0.0
        %v1847 = vmax.f32 %v1839, 0.0
        %v1848 = vmax.f32 %v1840, 0.0
        %v1849 = vmax.f32 %v1841, 0.0
        %v1850 = vmax.f32 %v1842, 0.0
        %v1851 = vmax.f32 %v1843, 0.0
        %v1852 = vmax.f32 %v1844, 0.0
        %1853 = vst [vmem:[%s262] sm:$0xff] %v1845
        %1854 = vst [vmem:[%s262 + $0x8] sm:$0xff] %v1846
        %1855 = vst [vmem:[%s262 + $0x10] sm:$0xff] %v1847
        %1856 = vst [vmem:[%s262 + $0x18] sm:$0xff] %v1848
        %1857 = vst [vmem:[%s262 + $0x20] sm:$0xff] %v1849
        %1858 = vst [vmem:[%s262 + $0x28] sm:$0xff] %v1850
        %1859 = vst [vmem:[%s262 + $0x30] sm:$0xff] %v1851
        %1860 = vst [vmem:[%s262 + $0x38] sm:$0xff] %v1852
        %s1861 = sand.u32 %s143, 1
        %s1862 = scalar_lea.sflag [#allocation4], %s1861
        %s1863 = sand.u32 %s143, 1
        %s1864 = smul.addr %s1863, 64
        %s1865 = scalar_lea.vmem [#allocation7], %s1864
        // Predicated region
        $region41: #{tpu_custom_call.1} parent=31 // pred_check
          %p1866 = pneg %p153
        $region42: #{tpu_custom_call.1} parent=31 // pred_check_branch
          %1868 = sbr.rel (%p1866) target = $region44
        $region43: #{tpu_custom_call.1} parent=31 // pred_region
          %s1870 = ssub.s32 1024, 1024
          %1871 = vsyncadd %s1862, %s1870
          %s1872 = smul.addr %s28, 8
          %s1873 = sadd.s32 %s29, %s1872
          %s1874 = smul.addr %s27, 16
          %s1875 = sadd.s32 %s1873, %s1874
          %s1876 = smul.addr %s1875, 128
          %s1877 = scalar_lea.hbm %s3, %s1876
          %s1878 = sshll.u32 %s1865, 4
          %s1879 = int_to_ptr.vmem [resolvable:$true] %s1878
          %1884 = dma.vmem_to_hbm [thread:$0]  %s1879, 1024, %s1877, %s1862, 128, 128, 8
        $region44: #{tpu_custom_call.1} parent=31 // pred_fallthru
          _
      $region32: #{tpu_custom_call.1} parent=5 // pred_fallthru
        _
      %p1885 = scmp.le.s32.totalorder 2, %s16
      // Predicated region
      $region45: #{tpu_custom_call.1} parent=5 // pred_check
        %p1886 = pneg %p1885
      $region46: #{tpu_custom_call.1} parent=5 // pred_check_branch
        %1888 = sbr.rel (%p1886) target = $region48
      $region47: #{tpu_custom_call.1} parent=5 // pred_region
        %s1889 = ssub.s32 %s16, 2
        // Predicated region
        $region49: #{tpu_custom_call.1} parent=47 // pred_check
          %p1890 = pneg %p159
        $region50: #{tpu_custom_call.1} parent=47 // pred_check_branch
          %1892 = sbr.rel (%p1890) target = $region52
        $region51: #{tpu_custom_call.1} parent=47 // pred_region
          %s1893 = sand.u32 %s144, 1
          %s1894 = scalar_lea.sflag [#allocation4], %s1893
          %s1895 = sand.u32 %s144, 1
          %s1896 = smul.addr %s1895, 64
          %s1897 = scalar_lea.vmem [#allocation7], %s1896
          %1898 = dma.done %s1894, 1024
        $region52: #{tpu_custom_call.1} parent=47 // pred_fallthru
          _
      $region48: #{tpu_custom_call.1} parent=5 // pred_fallthru
        _
    $region6: #{tpu_custom_call.1} parent=1 // loop_footer
      %s20 = sadd.s32 1, %s16
    $region7: #{tpu_custom_call.1} parent=1 // loop_footer_branch
      %15 = sbr.rel target = $region3
    $region8: #{tpu_custom_call.1} parent=1 // loop_exit
      _
    %1899 = vsyncpa [#allocation3], 1
    %s1900 = scalar_lea.sflag [#allocation3], 1
    %1901 = vsyncpa %s1900, 1
    %1902 = vsyncpa [#allocation6], 1
    %1903 = vsyncpa [#allocation4], 1
    %s1904 = scalar_lea.sflag [#allocation4], 1
    %1905 = vsyncpa %s1904, 1

</llo_original>
